<compile_context>
chip_gen: v7x
topology: tpu7x:2x2x1
jax: 0.10.0
libtpu: 0.0.40
codegen_flags: <defaults>
</compile_context>

<pallas_src>
import jax
import jax.numpy as jnp
from jax.experimental import pallas as pl
from jax.experimental.pallas import tpu as pltpu

_EPS = 1e-5

_PAD_IN = 128    # input features 96 -> 128
_PAD_OUT = 128   # final output 2 -> 128 (lane-dense store)

# Packed-vector blob layout: row 0 = bias, row 1 = gamma, row 2 = beta.
# Lane offsets per layer (all multiples of 128 -> lane-aligned static slices).
_VEC_OFFS = (0, 512, 1024, 1280, 1536)
_VEC_WIDTHS = (512, 512, 256, 256, _PAD_OUT)
_VEC_TOTAL = 1664


def _bn_train(h, gamma, beta):
    # BatchNorm1d training-mode forward: per-batch mean + biased variance.
    mean = jnp.mean(h, axis=0, keepdims=True)
    var = jnp.mean((h - mean) ** 2, axis=0, keepdims=True)
    return (h - mean) * jax.lax.rsqrt(var + _EPS) * gamma + beta


def arm_mlp_kernel(x_ref, w1_ref, w2_ref, w3_ref, w4_ref, w5_ref, vec_ref,
                   out_ref):
    h = x_ref[...]  # f32 activations, [B, 128]

    def layer(h, w_ref, idx, with_bn):
        off, n = _VEC_OFFS[idx], _VEC_WIDTHS[idx]
        b = vec_ref[0:1, off:off + n]
        # bf16 x bf16 MXU matmul, f32 accumulation; bias add in f32.
        h = jnp.dot(h.astype(jnp.bfloat16), w_ref[...],
                    preferred_element_type=jnp.float32) + b
        if with_bn:
            h = jnp.maximum(h, 0.0)
            g = vec_ref[1:2, off:off + n]
            be = vec_ref[2:3, off:off + n]
            h = _bn_train(h, g, be)
        return h

    h = layer(h, w1_ref, 0, True)
    h = layer(h, w2_ref, 1, True)
    h = layer(h, w3_ref, 2, True)
    h = layer(h, w4_ref, 3, True)
    h = layer(h, w5_ref, 4, False)   # layer5: no activation / bn

    out_ref[...] = h.astype(out_ref.dtype)


def prepare_kernel_params(params):
    """Pad / pack / cast params into the 6 kernel operands.

    params: w{i}T [in,out] f32, b{i} [1,out] f32, g{i}/be{i} [1,out] f32.
    Returns (w1..w5 in bf16 with padded edges, packed f32 vector blob)."""
    w1 = params["w1T"]
    w1 = jnp.pad(w1, ((0, _PAD_IN - w1.shape[0]), (0, 0)))      # 96 -> 128 rows
    w5 = params["w5T"]
    w5 = jnp.pad(w5, ((0, 0), (0, _PAD_OUT - w5.shape[1])))     # 2 -> 128 cols
    ws = (w1, params["w2T"], params["w3T"], params["w4T"], w5)
    ws = tuple(w.astype(jnp.bfloat16) for w in ws)

    vec = jnp.zeros((3, _VEC_TOTAL), dtype=jnp.float32)
    for i in range(5):
        off, n = _VEC_OFFS[i], _VEC_WIDTHS[i]
        b = params[f"b{i + 1}"]
        b = jnp.pad(b, ((0, 0), (0, n - b.shape[1])))
        vec = vec.at[0:1, off:off + n].set(b)
        if i < 4:
            vec = vec.at[1:2, off:off + n].set(params[f"g{i + 1}"])
            vec = vec.at[2:3, off:off + n].set(params[f"be{i + 1}"])
    return ws + (vec,)


@jax.jit
def arm_network_forward(x, kernel_params):
    """x: [B, window*joints*2] f32. kernel_params: output of prepare_kernel_params."""
    B, F = x.shape
    xp = jnp.pad(x.astype(jnp.float32), ((0, 0), (0, _PAD_IN - F)))
    spec = pl.BlockSpec(memory_space=pltpu.MemorySpace.VMEM)
    out = pl.pallas_call(
        arm_mlp_kernel,
        out_shape=jax.ShapeDtypeStruct((B, _PAD_OUT), jnp.float32),
        in_specs=[spec] * (1 + len(kernel_params)),
        out_specs=spec,
    )(xp, *kernel_params)
    return out[:, :2]


def init_params(key, window, joints=6):
    """PyTorch-default-style init (uniform +-1/sqrt(fan_in)).

    Linear weights stored pre-transposed as [in, out]. BN gamma=1, beta=0
    (fresh module, training-mode forward)."""
    dims = [window * joints * 2, 512, 512, 256, 256, 2]
    params = {}
    keys = jax.random.split(key, 2 * (len(dims) - 1))
    for i in range(len(dims) - 1):
        fan_in, fan_out = dims[i], dims[i + 1]
        bound = 1.0 / jnp.sqrt(jnp.float32(fan_in))
        params[f"w{i + 1}T"] = jax.random.uniform(
            keys[2 * i], (fan_in, fan_out), minval=-bound, maxval=bound,
            dtype=jnp.float32)
        params[f"b{i + 1}"] = jax.random.uniform(
            keys[2 * i + 1], (1, fan_out), minval=-bound, maxval=bound,
            dtype=jnp.float32)
    for i, n in enumerate([512, 512, 256, 256], start=1):
        params[f"g{i}"] = jnp.ones((1, n), dtype=jnp.float32)
        params[f"be{i}"] = jnp.zeros((1, n), dtype=jnp.float32)
    return params


def reference_forward(x, params):
    """Pure-JAX reference with the same bf16-weight / f32-accum precision."""
    h = x.astype(jnp.float32)
    for i in range(1, 6):
        w = params[f"w{i}T"].astype(jnp.bfloat16)
        h = jnp.dot(h.astype(jnp.bfloat16), w,
                    preferred_element_type=jnp.float32) + params[f"b{i}"]
        if i < 5:
            h = jnp.maximum(h, 0.0)
            h = _bn_train(h, params[f"g{i}"], params[f"be{i}"])
    return h


if __name__ == "__main__":
    window, joints = 8, 6
    batch = 8
    in_features = window * joints * 2  # 96

    key = jax.random.PRNGKey(0)
    k_x, k_p = jax.random.split(key)
    x = jax.random.normal(k_x, (batch, in_features), dtype=jnp.float32)
    params = init_params(k_p, window, joints)
    kernel_params = prepare_kernel_params(params)

    out = arm_network_forward(x, kernel_params)
    out = jax.block_until_ready(out)
    assert out.shape == (batch, 2), out.shape

    ref = reference_forward(x, params)
    max_err = float(jnp.max(jnp.abs(out - ref)))
    assert jnp.allclose(out, ref, rtol=1e-2, atol=1e-2), max_err

    print("KERNEL_OK")
</pallas_src>

<mosaic_0001>
module attributes {stable_mosaic.version = 11 : i64} {
  func.func @arm_mlp_kernel(%arg0: memref<8x128xf32, #tpu.memory_space<vmem>>, %arg1: memref<128x512xbf16, #tpu.memory_space<vmem>>, %arg2: memref<512x512xbf16, #tpu.memory_space<vmem>>, %arg3: memref<512x256xbf16, #tpu.memory_space<vmem>>, %arg4: memref<256x256xbf16, #tpu.memory_space<vmem>>, %arg5: memref<256x128xbf16, #tpu.memory_space<vmem>>, %arg6: memref<3x1664xf32, #tpu.memory_space<vmem>>, %arg7: memref<8x128xf32, #tpu.memory_space<vmem>>) attributes {dimension_semantics = [], scalar_prefetch = 0 : i64, scratch_operands = 0 : i64, tpu.core_type = #tpu.core_type<tc>} {
    %c0 = arith.constant 0 : index
    %c0_0 = arith.constant 0 : index
    %0 = vector.load %arg0[%c0, %c0_0] : memref<8x128xf32, #tpu.memory_space<vmem>>, vector<8x128xf32>
    %c0_1 = arith.constant 0 : index
    %c0_2 = arith.constant 0 : index
    %1 = vector.load %arg6[%c0_1, %c0_2] : memref<3x1664xf32, #tpu.memory_space<vmem>>, vector<1x512xf32>
    %2 = arith.truncf %0 : vector<8x128xf32> to vector<8x128xbf16>
    %c0_3 = arith.constant 0 : index
    %c0_4 = arith.constant 0 : index
    %3 = vector.load %arg1[%c0_3, %c0_4] : memref<128x512xbf16, #tpu.memory_space<vmem>>, vector<128x512xbf16>
    %cst = arith.constant dense<0.000000e+00> : vector<8x512xf32>
    %4 = tpu.matmul %2, %3, %cst {dimension_numbers = #tpu.dot_dimension_numbers<[1], [0], [0], [1], [0, 0, 1, 1], [], []>} : vector<8x128xbf16>, vector<128x512xbf16>, vector<8x512xf32> -> vector<8x512xf32>
    %5 = vector.broadcast %1 : vector<1x512xf32> to vector<8x512xf32>
    %6 = arith.addf %4, %5 : vector<8x512xf32>
    %cst_5 = arith.constant 0.000000e+00 : f32
    %7 = vector.broadcast %cst_5 : f32 to vector<8x512xf32>
    %8 = arith.maximumf %6, %7 : vector<8x512xf32>
    %c1 = arith.constant 1 : index
    %c0_6 = arith.constant 0 : index
    %9 = vector.load %arg6[%c1, %c0_6] : memref<3x1664xf32, #tpu.memory_space<vmem>>, vector<1x512xf32>
    %c2 = arith.constant 2 : index
    %c0_7 = arith.constant 0 : index
    %10 = vector.load %arg6[%c2, %c0_7] : memref<3x1664xf32, #tpu.memory_space<vmem>>, vector<1x512xf32>
    %cst_8 = arith.constant dense<0.000000e+00> : vector<512xf32>
    %11 = vector.multi_reduction <add>, %8, %cst_8 [0] : vector<8x512xf32> to vector<512xf32>
    %12 = vector.shape_cast %11 : vector<512xf32> to vector<1x512xf32>
    %cst_9 = arith.constant 8.000000e+00 : f32
    %13 = vector.broadcast %cst_9 : f32 to vector<1x512xf32>
    %14 = arith.divf %12, %13 : vector<1x512xf32>
    %15 = vector.broadcast %14 : vector<1x512xf32> to vector<8x512xf32>
    %16 = arith.subf %8, %15 : vector<8x512xf32>
    %17 = arith.mulf %16, %16 : vector<8x512xf32>
    %cst_10 = arith.constant dense<0.000000e+00> : vector<512xf32>
    %18 = vector.multi_reduction <add>, %17, %cst_10 [0] : vector<8x512xf32> to vector<512xf32>
    %19 = vector.shape_cast %18 : vector<512xf32> to vector<1x512xf32>
    %cst_11 = arith.constant 8.000000e+00 : f32
    %20 = vector.broadcast %cst_11 : f32 to vector<1x512xf32>
    %21 = arith.divf %19, %20 : vector<1x512xf32>
    %22 = vector.broadcast %14 : vector<1x512xf32> to vector<8x512xf32>
    %23 = arith.subf %8, %22 : vector<8x512xf32>
    %cst_12 = arith.constant 9.99999974E-6 : f32
    %24 = vector.broadcast %cst_12 : f32 to vector<1x512xf32>
    %25 = arith.addf %21, %24 : vector<1x512xf32>
    %26 = math.rsqrt %25 : vector<1x512xf32>
    %27 = vector.broadcast %26 : vector<1x512xf32> to vector<8x512xf32>
    %28 = arith.mulf %23, %27 : vector<8x512xf32>
    %29 = vector.broadcast %9 : vector<1x512xf32> to vector<8x512xf32>
    %30 = arith.mulf %28, %29 : vector<8x512xf32>
    %31 = vector.broadcast %10 : vector<1x512xf32> to vector<8x512xf32>
    %32 = arith.addf %30, %31 : vector<8x512xf32>
    %c0_13 = arith.constant 0 : index
    %c512 = arith.constant 512 : index
    %33 = vector.load %arg6[%c0_13, %c512] : memref<3x1664xf32, #tpu.memory_space<vmem>>, vector<1x512xf32>
    %34 = arith.truncf %32 : vector<8x512xf32> to vector<8x512xbf16>
    %c0_14 = arith.constant 0 : index
    %c0_15 = arith.constant 0 : index
    %35 = vector.load %arg2[%c0_14, %c0_15] : memref<512x512xbf16, #tpu.memory_space<vmem>>, vector<512x512xbf16>
    %cst_16 = arith.constant dense<0.000000e+00> : vector<8x512xf32>
    %36 = tpu.matmul %34, %35, %cst_16 {dimension_numbers = #tpu.dot_dimension_numbers<[1], [0], [0], [1], [0, 0, 1, 1], [], []>} : vector<8x512xbf16>, vector<512x512xbf16>, vector<8x512xf32> -> vector<8x512xf32>
    %37 = vector.broadcast %33 : vector<1x512xf32> to vector<8x512xf32>
    %38 = arith.addf %36, %37 : vector<8x512xf32>
    %cst_17 = arith.constant 0.000000e+00 : f32
    %39 = vector.broadcast %cst_17 : f32 to vector<8x512xf32>
    %40 = arith.maximumf %38, %39 : vector<8x512xf32>
    %c1_18 = arith.constant 1 : index
    %c512_19 = arith.constant 512 : index
    %41 = vector.load %arg6[%c1_18, %c512_19] : memref<3x1664xf32, #tpu.memory_space<vmem>>, vector<1x512xf32>
    %c2_20 = arith.constant 2 : index
    %c512_21 = arith.constant 512 : index
    %42 = vector.load %arg6[%c2_20, %c512_21] : memref<3x1664xf32, #tpu.memory_space<vmem>>, vector<1x512xf32>
    %cst_22 = arith.constant dense<0.000000e+00> : vector<512xf32>
    %43 = vector.multi_reduction <add>, %40, %cst_22 [0] : vector<8x512xf32> to vector<512xf32>
    %44 = vector.shape_cast %43 : vector<512xf32> to vector<1x512xf32>
    %cst_23 = arith.constant 8.000000e+00 : f32
    %45 = vector.broadcast %cst_23 : f32 to vector<1x512xf32>
    %46 = arith.divf %44, %45 : vector<1x512xf32>
    %47 = vector.broadcast %46 : vector<1x512xf32> to vector<8x512xf32>
    %48 = arith.subf %40, %47 : vector<8x512xf32>
    %49 = arith.mulf %48, %48 : vector<8x512xf32>
    %cst_24 = arith.constant dense<0.000000e+00> : vector<512xf32>
    %50 = vector.multi_reduction <add>, %49, %cst_24 [0] : vector<8x512xf32> to vector<512xf32>
    %51 = vector.shape_cast %50 : vector<512xf32> to vector<1x512xf32>
    %cst_25 = arith.constant 8.000000e+00 : f32
    %52 = vector.broadcast %cst_25 : f32 to vector<1x512xf32>
    %53 = arith.divf %51, %52 : vector<1x512xf32>
    %54 = vector.broadcast %46 : vector<1x512xf32> to vector<8x512xf32>
    %55 = arith.subf %40, %54 : vector<8x512xf32>
    %cst_26 = arith.constant 9.99999974E-6 : f32
    %56 = vector.broadcast %cst_26 : f32 to vector<1x512xf32>
    %57 = arith.addf %53, %56 : vector<1x512xf32>
    %58 = math.rsqrt %57 : vector<1x512xf32>
    %59 = vector.broadcast %58 : vector<1x512xf32> to vector<8x512xf32>
    %60 = arith.mulf %55, %59 : vector<8x512xf32>
    %61 = vector.broadcast %41 : vector<1x512xf32> to vector<8x512xf32>
    %62 = arith.mulf %60, %61 : vector<8x512xf32>
    %63 = vector.broadcast %42 : vector<1x512xf32> to vector<8x512xf32>
    %64 = arith.addf %62, %63 : vector<8x512xf32>
    %c0_27 = arith.constant 0 : index
    %c1024 = arith.constant 1024 : index
    %65 = vector.load %arg6[%c0_27, %c1024] : memref<3x1664xf32, #tpu.memory_space<vmem>>, vector<1x256xf32>
    %66 = arith.truncf %64 : vector<8x512xf32> to vector<8x512xbf16>
    %c0_28 = arith.constant 0 : index
    %c0_29 = arith.constant 0 : index
    %67 = vector.load %arg3[%c0_28, %c0_29] : memref<512x256xbf16, #tpu.memory_space<vmem>>, vector<512x256xbf16>
    %cst_30 = arith.constant dense<0.000000e+00> : vector<8x256xf32>
    %68 = tpu.matmul %66, %67, %cst_30 {dimension_numbers = #tpu.dot_dimension_numbers<[1], [0], [0], [1], [0, 0, 1, 1], [], []>} : vector<8x512xbf16>, vector<512x256xbf16>, vector<8x256xf32> -> vector<8x256xf32>
    %69 = vector.broadcast %65 : vector<1x256xf32> to vector<8x256xf32>
    %70 = arith.addf %68, %69 : vector<8x256xf32>
    %cst_31 = arith.constant 0.000000e+00 : f32
    %71 = vector.broadcast %cst_31 : f32 to vector<8x256xf32>
    %72 = arith.maximumf %70, %71 : vector<8x256xf32>
    %c1_32 = arith.constant 1 : index
    %c1024_33 = arith.constant 1024 : index
    %73 = vector.load %arg6[%c1_32, %c1024_33] : memref<3x1664xf32, #tpu.memory_space<vmem>>, vector<1x256xf32>
    %c2_34 = arith.constant 2 : index
    %c1024_35 = arith.constant 1024 : index
    %74 = vector.load %arg6[%c2_34, %c1024_35] : memref<3x1664xf32, #tpu.memory_space<vmem>>, vector<1x256xf32>
    %cst_36 = arith.constant dense<0.000000e+00> : vector<256xf32>
    %75 = vector.multi_reduction <add>, %72, %cst_36 [0] : vector<8x256xf32> to vector<256xf32>
    %76 = vector.shape_cast %75 : vector<256xf32> to vector<1x256xf32>
    %cst_37 = arith.constant 8.000000e+00 : f32
    %77 = vector.broadcast %cst_37 : f32 to vector<1x256xf32>
    %78 = arith.divf %76, %77 : vector<1x256xf32>
    %79 = vector.broadcast %78 : vector<1x256xf32> to vector<8x256xf32>
    %80 = arith.subf %72, %79 : vector<8x256xf32>
    %81 = arith.mulf %80, %80 : vector<8x256xf32>
    %cst_38 = arith.constant dense<0.000000e+00> : vector<256xf32>
    %82 = vector.multi_reduction <add>, %81, %cst_38 [0] : vector<8x256xf32> to vector<256xf32>
    %83 = vector.shape_cast %82 : vector<256xf32> to vector<1x256xf32>
    %cst_39 = arith.constant 8.000000e+00 : f32
    %84 = vector.broadcast %cst_39 : f32 to vector<1x256xf32>
    %85 = arith.divf %83, %84 : vector<1x256xf32>
    %86 = vector.broadcast %78 : vector<1x256xf32> to vector<8x256xf32>
    %87 = arith.subf %72, %86 : vector<8x256xf32>
    %cst_40 = arith.constant 9.99999974E-6 : f32
    %88 = vector.broadcast %cst_40 : f32 to vector<1x256xf32>
    %89 = arith.addf %85, %88 : vector<1x256xf32>
    %90 = math.rsqrt %89 : vector<1x256xf32>
    %91 = vector.broadcast %90 : vector<1x256xf32> to vector<8x256xf32>
    %92 = arith.mulf %87, %91 : vector<8x256xf32>
    %93 = vector.broadcast %73 : vector<1x256xf32> to vector<8x256xf32>
    %94 = arith.mulf %92, %93 : vector<8x256xf32>
    %95 = vector.broadcast %74 : vector<1x256xf32> to vector<8x256xf32>
    %96 = arith.addf %94, %95 : vector<8x256xf32>
    %c0_41 = arith.constant 0 : index
    %c1280 = arith.constant 1280 : index
    %97 = vector.load %arg6[%c0_41, %c1280] : memref<3x1664xf32, #tpu.memory_space<vmem>>, vector<1x256xf32>
    %98 = arith.truncf %96 : vector<8x256xf32> to vector<8x256xbf16>
    %c0_42 = arith.constant 0 : index
    %c0_43 = arith.constant 0 : index
    %99 = vector.load %arg4[%c0_42, %c0_43] : memref<256x256xbf16, #tpu.memory_space<vmem>>, vector<256x256xbf16>
    %cst_44 = arith.constant dense<0.000000e+00> : vector<8x256xf32>
    %100 = tpu.matmul %98, %99, %cst_44 {dimension_numbers = #tpu.dot_dimension_numbers<[1], [0], [0], [1], [0, 0, 1, 1], [], []>} : vector<8x256xbf16>, vector<256x256xbf16>, vector<8x256xf32> -> vector<8x256xf32>
    %101 = vector.broadcast %97 : vector<1x256xf32> to vector<8x256xf32>
    %102 = arith.addf %100, %101 : vector<8x256xf32>
    %cst_45 = arith.constant 0.000000e+00 : f32
    %103 = vector.broadcast %cst_45 : f32 to vector<8x256xf32>
    %104 = arith.maximumf %102, %103 : vector<8x256xf32>
    %c1_46 = arith.constant 1 : index
    %c1280_47 = arith.constant 1280 : index
    %105 = vector.load %arg6[%c1_46, %c1280_47] : memref<3x1664xf32, #tpu.memory_space<vmem>>, vector<1x256xf32>
    %c2_48 = arith.constant 2 : index
    %c1280_49 = arith.constant 1280 : index
    %106 = vector.load %arg6[%c2_48, %c1280_49] : memref<3x1664xf32, #tpu.memory_space<vmem>>, vector<1x256xf32>
    %cst_50 = arith.constant dense<0.000000e+00> : vector<256xf32>
    %107 = vector.multi_reduction <add>, %104, %cst_50 [0] : vector<8x256xf32> to vector<256xf32>
    %108 = vector.shape_cast %107 : vector<256xf32> to vector<1x256xf32>
    %cst_51 = arith.constant 8.000000e+00 : f32
    %109 = vector.broadcast %cst_51 : f32 to vector<1x256xf32>
    %110 = arith.divf %108, %109 : vector<1x256xf32>
    %111 = vector.broadcast %110 : vector<1x256xf32> to vector<8x256xf32>
    %112 = arith.subf %104, %111 : vector<8x256xf32>
    %113 = arith.mulf %112, %112 : vector<8x256xf32>
    %cst_52 = arith.constant dense<0.000000e+00> : vector<256xf32>
    %114 = vector.multi_reduction <add>, %113, %cst_52 [0] : vector<8x256xf32> to vector<256xf32>
    %115 = vector.shape_cast %114 : vector<256xf32> to vector<1x256xf32>
    %cst_53 = arith.constant 8.000000e+00 : f32
    %116 = vector.broadcast %cst_53 : f32 to vector<1x256xf32>
    %117 = arith.divf %115, %116 : vector<1x256xf32>
    %118 = vector.broadcast %110 : vector<1x256xf32> to vector<8x256xf32>
    %119 = arith.subf %104, %118 : vector<8x256xf32>
    %cst_54 = arith.constant 9.99999974E-6 : f32
    %120 = vector.broadcast %cst_54 : f32 to vector<1x256xf32>
    %121 = arith.addf %117, %120 : vector<1x256xf32>
    %122 = math.rsqrt %121 : vector<1x256xf32>
    %123 = vector.broadcast %122 : vector<1x256xf32> to vector<8x256xf32>
    %124 = arith.mulf %119, %123 : vector<8x256xf32>
    %125 = vector.broadcast %105 : vector<1x256xf32> to vector<8x256xf32>
    %126 = arith.mulf %124, %125 : vector<8x256xf32>
    %127 = vector.broadcast %106 : vector<1x256xf32> to vector<8x256xf32>
    %128 = arith.addf %126, %127 : vector<8x256xf32>
    %c0_55 = arith.constant 0 : index
    %c1536 = arith.constant 1536 : index
    %129 = vector.load %arg6[%c0_55, %c1536] : memref<3x1664xf32, #tpu.memory_space<vmem>>, vector<1x128xf32>
    %130 = arith.truncf %128 : vector<8x256xf32> to vector<8x256xbf16>
    %c0_56 = arith.constant 0 : index
    %c0_57 = arith.constant 0 : index
    %131 = vector.load %arg5[%c0_56, %c0_57] : memref<256x128xbf16, #tpu.memory_space<vmem>>, vector<256x128xbf16>
    %cst_58 = arith.constant dense<0.000000e+00> : vector<8x128xf32>
    %132 = tpu.matmul %130, %131, %cst_58 {dimension_numbers = #tpu.dot_dimension_numbers<[1], [0], [0], [1], [0, 0, 1, 1], [], []>} : vector<8x256xbf16>, vector<256x128xbf16>, vector<8x128xf32> -> vector<8x128xf32>
    %133 = vector.broadcast %129 : vector<1x128xf32> to vector<8x128xf32>
    %134 = arith.addf %132, %133 : vector<8x128xf32>
    %c0_59 = arith.constant 0 : index
    %c0_60 = arith.constant 0 : index
    %135 = vector.load %arg7[%c0_59, %c0_60] : memref<8x128xf32, #tpu.memory_space<vmem>>, vector<8x128xf32>
    tpu.vector_store %arg7[%c0_59, %c0_60], %134 {strides = array<i32>} : memref<8x128xf32, #tpu.memory_space<vmem>>, vector<8x128xf32>,
    return
  }
}

</mosaic_0001>

<llo_original>
// kernel: arm_network_forward.1
$region0: #{arm_network_forward.1}
  #allocation0 [shape = 'u32[]', space=smem, size = 0x4, offset = 0x4, fixed_abs, tag = 'smem constant byte address 0x4 - core index']
  #allocation1 [shape = 'u32[144,128]{1,0:T(1,128)}', space=vmem, size = 0x12000, scoped, tag = 'internal scratch']
  %s0 = inlined_call_operand.vmem [shape: f32[8,128], index: 0, kind: input, shape index: {}]
  %s1 = inlined_call_operand.hbm [shape: bf16[128,512], index: 1, kind: input, shape index: {}]
  %s2 = inlined_call_operand.hbm [shape: bf16[512,512], index: 2, kind: input, shape index: {}]
  %s3 = inlined_call_operand.hbm [shape: bf16[512,256], index: 3, kind: input, shape index: {}]
  %s4 = inlined_call_operand.hbm [shape: bf16[256,256], index: 4, kind: input, shape index: {}]
  %s5 = inlined_call_operand.hbm [shape: bf16[256,128], index: 5, kind: input, shape index: {}]
  %s6 = inlined_call_operand.hbm [shape: f32[3,1664], index: 6, kind: input, shape index: {}]
  %s7 = inlined_call_operand.vmem [shape: f32[8,128], index: 7, kind: output, shape index: {}]
  %s8 = sld [smem:[#allocation0]]
  $region62: #{arm_network_forward.1} parent=0
    _
  %s10 = ssub.s32 1, %s8
  %s11 = scalar_select 0, %s10, %s8
  $region1: #{arm_network_forward.1} parent=0
    #allocation2 [shape = 'u8[131072]{0}', space=vmem, size = 0x20000, scoped, tag = 'input window, operand 1, single buffered']
    #allocation3 [shape = 's32[1]{0}', space=sflag, size = 0x4, scoped, tag = 'scoped memory for arm_network_forward.1']
    #allocation4 [shape = 'u8[524288]{0}', space=vmem, size = 0x80000, scoped, tag = 'input window, operand 2, single buffered']
    #allocation5 [shape = 's32[1]{0}', space=sflag, size = 0x4, scoped, tag = 'scoped memory for arm_network_forward.1']
    #allocation6 [shape = 'u8[262144]{0}', space=vmem, size = 0x40000, scoped, tag = 'input window, operand 3, single buffered']
    #allocation7 [shape = 'u8[131072]{0}', space=vmem, size = 0x20000, scoped, tag = 'input window, operand 4, single buffered']
    #allocation8 [shape = 's32[1]{0}', space=sflag, size = 0x4, scoped, tag = 'scoped memory for arm_network_forward.1']
    #allocation9 [shape = 'u8[65536]{0}', space=vmem, size = 0x10000, scoped, tag = 'input window, operand 5, single buffered']
    #allocation10 [shape = 'u8[26624]{0}', space=vmem, size = 0x6800, scoped, tag = 'input window, operand 6, single buffered']
    #allocation11 [shape = 's32[1]{0}', space=sflag, size = 0x4, scoped, tag = 'scoped memory for arm_network_forward.1']
    %12 = vsyncpa [#allocation3], 0
    %13 = vsyncpa [#allocation5], 0
    %14 = vsyncpa [#allocation8], 0
    %15 = vsyncpa [#allocation11], 0
    // Predicated region
    $region2: #{arm_network_forward.1} parent=1 // pred_check
      _
    $region3: #{arm_network_forward.1} parent=1 // pred_check_branch
      %17 = sbr.rel (0) target = $region5
    $region4: #{arm_network_forward.1} parent=1 // pred_region
      _
    $region5: #{arm_network_forward.1} parent=1 // pred_fallthru
      _
    // Predicated region
    $region6: #{arm_network_forward.1} parent=1 // pred_check
      _
    $region7: #{arm_network_forward.1} parent=1 // pred_check_branch
      %19 = sbr.rel (0) target = $region9
    $region8: #{arm_network_forward.1} parent=1 // pred_region
      %s21 = ssub.s32 4096, 4096
      %22 = vsyncadd [#allocation3], %s21
      %s23 = sshll.u32 [#allocation2], 4
      %s24 = int_to_ptr.vmem [resolvable:$true] %s23
      %29 = dma.hbm_to_vmem [thread:$0]  %s1, 4096, %s24, [#allocation3], 256, 256, 16
    $region9: #{arm_network_forward.1} parent=1 // pred_fallthru
      _
    // Predicated region
    $region10: #{arm_network_forward.1} parent=1 // pred_check
      _
    $region11: #{arm_network_forward.1} parent=1 // pred_check_branch
      %31 = sbr.rel (0) target = $region13
    $region12: #{arm_network_forward.1} parent=1 // pred_region
      %s33 = ssub.s32 16384, 16384
      %34 = vsyncadd [#allocation5], %s33
      %s35 = sshll.u32 [#allocation4], 4
      %s36 = int_to_ptr.vmem [resolvable:$true] %s35
      %41 = dma.hbm_to_vmem [thread:$0]  %s2, 16384, %s36, [#allocation5], 256, 256, 16
    $region13: #{arm_network_forward.1} parent=1 // pred_fallthru
      _
    // Predicated region
    $region14: #{arm_network_forward.1} parent=1 // pred_check
      _
    $region15: #{arm_network_forward.1} parent=1 // pred_check_branch
      %43 = sbr.rel (0) target = $region17
    $region16: #{arm_network_forward.1} parent=1 // pred_region
      %s45 = ssub.s32 8192, 8192
      %46 = vsyncadd [#allocation5], %s45
      %s47 = sshll.u32 [#allocation6], 4
      %s48 = int_to_ptr.vmem [resolvable:$true] %s47
      %53 = dma.hbm_to_vmem [thread:$0]  %s3, 8192, %s48, [#allocation5], 128, 128, 8
    $region17: #{arm_network_forward.1} parent=1 // pred_fallthru
      _
    // Predicated region
    $region18: #{arm_network_forward.1} parent=1 // pred_check
      _
    $region19: #{arm_network_forward.1} parent=1 // pred_check_branch
      %55 = sbr.rel (0) target = $region21
    $region20: #{arm_network_forward.1} parent=1 // pred_region
      %s57 = ssub.s32 4096, 4096
      %58 = vsyncadd [#allocation8], %s57
      %s59 = sshll.u32 [#allocation7], 4
      %s60 = int_to_ptr.vmem [resolvable:$true] %s59
      %65 = dma.hbm_to_vmem [thread:$0]  %s4, 4096, %s60, [#allocation8], 128, 128, 8
    $region21: #{arm_network_forward.1} parent=1 // pred_fallthru
      _
    // Predicated region
    $region22: #{arm_network_forward.1} parent=1 // pred_check
      _
    $region23: #{arm_network_forward.1} parent=1 // pred_check_branch
      %67 = sbr.rel (0) target = $region25
    $region24: #{arm_network_forward.1} parent=1 // pred_region
      %s69 = ssub.s32 2048, 2048
      %70 = vsyncadd [#allocation8], %s69
      %s71 = sshll.u32 [#allocation9], 4
      %s72 = int_to_ptr.vmem [resolvable:$true] %s71
      %77 = dma.hbm_to_vmem [thread:$0]  %s5, 2048, %s72, [#allocation8], 64, 64, 4
    $region25: #{arm_network_forward.1} parent=1 // pred_fallthru
      _
    // Predicated region
    $region26: #{arm_network_forward.1} parent=1 // pred_check
      _
    $region27: #{arm_network_forward.1} parent=1 // pred_check_branch
      %79 = sbr.rel (0) target = $region29
    $region28: #{arm_network_forward.1} parent=1 // pred_region
      %s81 = ssub.s32 832, 832
      %82 = vsyncadd [#allocation11], %s81
      %s84 = sshll.u32 [#allocation10], 4
      %s85 = int_to_ptr.vmem [resolvable:$true] %s84
      %87 = dma.hbm_to_vmem [thread:$0]  %s6, 832, %s85, [#allocation11]
    $region29: #{arm_network_forward.1} parent=1 // pred_fallthru
      _
    // Predicated region
    $region30: #{arm_network_forward.1} parent=1 // pred_check
      _
    $region31: #{arm_network_forward.1} parent=1 // pred_check_branch
      %89 = sbr.rel (0) target = $region33
    $region32: #{arm_network_forward.1} parent=1 // pred_region
      %90 = dma.done [#allocation3], 4096
    $region33: #{arm_network_forward.1} parent=1 // pred_fallthru
      _
    // Predicated region
    $region34: #{arm_network_forward.1} parent=1 // pred_check
      _
    $region35: #{arm_network_forward.1} parent=1 // pred_check_branch
      %92 = sbr.rel (0) target = $region37
    $region36: #{arm_network_forward.1} parent=1 // pred_region
      %93 = dma.done [#allocation5], 16384
    $region37: #{arm_network_forward.1} parent=1 // pred_fallthru
      _
    // Predicated region
    $region38: #{arm_network_forward.1} parent=1 // pred_check
      _
    $region39: #{arm_network_forward.1} parent=1 // pred_check_branch
      %95 = sbr.rel (0) target = $region41
    $region40: #{arm_network_forward.1} parent=1 // pred_region
      %96 = dma.done [#allocation5], 8192
    $region41: #{arm_network_forward.1} parent=1 // pred_fallthru
      _
    // Predicated region
    $region42: #{arm_network_forward.1} parent=1 // pred_check
      _
    $region43: #{arm_network_forward.1} parent=1 // pred_check_branch
      %98 = sbr.rel (0) target = $region45
    $region44: #{arm_network_forward.1} parent=1 // pred_region
      %99 = dma.done [#allocation8], 4096
    $region45: #{arm_network_forward.1} parent=1 // pred_fallthru
      _
    // Predicated region
    $region46: #{arm_network_forward.1} parent=1 // pred_check
      _
    $region47: #{arm_network_forward.1} parent=1 // pred_check_branch
      %101 = sbr.rel (0) target = $region49
    $region48: #{arm_network_forward.1} parent=1 // pred_region
      %102 = dma.done [#allocation8], 2048
    $region49: #{arm_network_forward.1} parent=1 // pred_fallthru
      _
    // Predicated region
    $region50: #{arm_network_forward.1} parent=1 // pred_check
      _
    $region51: #{arm_network_forward.1} parent=1 // pred_check_branch
      %104 = sbr.rel (0) target = $region53
    $region52: #{arm_network_forward.1} parent=1 // pred_region
      %105 = dma.done [#allocation11], 832
    $region53: #{arm_network_forward.1} parent=1 // pred_fallthru
      _
    %v107 = vld [vmem:[%s0] sm:$0xff]
    %v108 = vld [vmem:[#allocation10] ss:$4 sm:$0xf]
    %v109 = vpack.c.bf16 %v107, %v107
    %v110 = vld [vmem:[#allocation2] sm:$0xff]
    %v111 = vld [vmem:[#allocation2 + $0x8] sm:$0xff]
    %v112 = vld [vmem:[#allocation2 + $0x10] sm:$0xff]
    %v113 = vld [vmem:[#allocation2 + $0x18] sm:$0xff]
    %v114 = vld [vmem:[#allocation2 + $0x20] sm:$0xff]
    %v115 = vld [vmem:[#allocation2 + $0x28] sm:$0xff]
    %v116 = vld [vmem:[#allocation2 + $0x30] sm:$0xff]
    %v117 = vld [vmem:[#allocation2 + $0x38] sm:$0xff]
    %v118 = vld [vmem:[#allocation2 + $0x40] sm:$0xff]
    %v119 = vld [vmem:[#allocation2 + $0x48] sm:$0xff]
    %v120 = vld [vmem:[#allocation2 + $0x50] sm:$0xff]
    %v121 = vld [vmem:[#allocation2 + $0x58] sm:$0xff]
    %v122 = vld [vmem:[#allocation2 + $0x60] sm:$0xff]
    %v123 = vld [vmem:[#allocation2 + $0x68] sm:$0xff]
    %v124 = vld [vmem:[#allocation2 + $0x70] sm:$0xff]
    %v125 = vld [vmem:[#allocation2 + $0x78] sm:$0xff]
    %v126 = vld [vmem:[#allocation2 + $0x80] sm:$0xff]
    %v127 = vld [vmem:[#allocation2 + $0x88] sm:$0xff]
    %v128 = vld [vmem:[#allocation2 + $0x90] sm:$0xff]
    %v129 = vld [vmem:[#allocation2 + $0x98] sm:$0xff]
    %v130 = vld [vmem:[#allocation2 + $0xa0] sm:$0xff]
    %v131 = vld [vmem:[#allocation2 + $0xa8] sm:$0xff]
    %v132 = vld [vmem:[#allocation2 + $0xb0] sm:$0xff]
    %v133 = vld [vmem:[#allocation2 + $0xb8] sm:$0xff]
    %v134 = vld [vmem:[#allocation2 + $0xc0] sm:$0xff]
    %v135 = vld [vmem:[#allocation2 + $0xc8] sm:$0xff]
    %v136 = vld [vmem:[#allocation2 + $0xd0] sm:$0xff]
    %v137 = vld [vmem:[#allocation2 + $0xd8] sm:$0xff]
    %v138 = vld [vmem:[#allocation2 + $0xe0] sm:$0xff]
    %v139 = vld [vmem:[#allocation2 + $0xe8] sm:$0xff]
    %v140 = vld [vmem:[#allocation2 + $0xf0] sm:$0xff]
    %v141 = vld [vmem:[#allocation2 + $0xf8] sm:$0xff]
    %v143 = vlaneseq
    %v144 = vshrl.u32 %v143, 7
    %v145 = vsub.s32 0, %v144
    %v146 = vrot.slane %v108, %v145
    %v147 = vlaneseq
    %v148 = vshrl.u32 %v147, 7
    %v149 = vsub.s32 1, %v148
    %v150 = vrot.slane %v108, %v149
    %v151 = vlaneseq
    %v152 = vshrl.u32 %v151, 7
    %v153 = vsub.s32 2, %v152
    %v154 = vrot.slane %v108, %v153
    %v155 = vlaneseq
    %v156 = vshrl.u32 %v155, 7
    %v157 = vsub.s32 3, %v156
    %v158 = vrot.slane %v108, %v157
    %v195 = vunpack.c.l.b16 %v110
    %v196 = vunpack.c.h.b16 %v110
    %v197 = vunpack.c.l.b16 %v111
    %v198 = vunpack.c.h.b16 %v111
    %v199 = vunpack.c.l.b16 %v112
    %v200 = vunpack.c.h.b16 %v112
    %v201 = vunpack.c.l.b16 %v113
    %v202 = vunpack.c.h.b16 %v113
    %v203 = vunpack.c.l.b16 %v114
    %v204 = vunpack.c.h.b16 %v114
    %v205 = vunpack.c.l.b16 %v115
    %v206 = vunpack.c.h.b16 %v115
    %v207 = vunpack.c.l.b16 %v116
    %v208 = vunpack.c.h.b16 %v116
    %v209 = vunpack.c.l.b16 %v117
    %v210 = vunpack.c.h.b16 %v117
    %v211 = vunpack.c.l.b16 %v118
    %v212 = vunpack.c.h.b16 %v118
    %v213 = vunpack.c.l.b16 %v119
    %v214 = vunpack.c.h.b16 %v119
    %v215 = vunpack.c.l.b16 %v120
    %v216 = vunpack.c.h.b16 %v120
    %v217 = vunpack.c.l.b16 %v121
    %v218 = vunpack.c.h.b16 %v121
    %v219 = vunpack.c.l.b16 %v122
    %v220 = vunpack.c.h.b16 %v122
    %v221 = vunpack.c.l.b16 %v123
    %v222 = vunpack.c.h.b16 %v123
    %v223 = vunpack.c.l.b16 %v124
    %v224 = vunpack.c.h.b16 %v124
    %v225 = vunpack.c.l.b16 %v125
    %v226 = vunpack.c.h.b16 %v125
    %v227 = vunpack.c.l.b16 %v126
    %v228 = vunpack.c.h.b16 %v126
    %v229 = vunpack.c.l.b16 %v127
    %v230 = vunpack.c.h.b16 %v127
    %v231 = vunpack.c.l.b16 %v128
    %v232 = vunpack.c.h.b16 %v128
    %v233 = vunpack.c.l.b16 %v129
    %v234 = vunpack.c.h.b16 %v129
    %v235 = vunpack.c.l.b16 %v130
    %v236 = vunpack.c.h.b16 %v130
    %v237 = vunpack.c.l.b16 %v131
    %v238 = vunpack.c.h.b16 %v131
    %v239 = vunpack.c.l.b16 %v132
    %v240 = vunpack.c.h.b16 %v132
    %v241 = vunpack.c.l.b16 %v133
    %v242 = vunpack.c.h.b16 %v133
    %v243 = vunpack.c.l.b16 %v134
    %v244 = vunpack.c.h.b16 %v134
    %v245 = vunpack.c.l.b16 %v135
    %v246 = vunpack.c.h.b16 %v135
    %v247 = vunpack.c.l.b16 %v136
    %v248 = vunpack.c.h.b16 %v136
    %v249 = vunpack.c.l.b16 %v137
    %v250 = vunpack.c.h.b16 %v137
    %v251 = vunpack.c.l.b16 %v138
    %v252 = vunpack.c.h.b16 %v138
    %v253 = vunpack.c.l.b16 %v139
    %v254 = vunpack.c.h.b16 %v139
    %v255 = vunpack.c.l.b16 %v140
    %v256 = vunpack.c.h.b16 %v140
    %v257 = vunpack.c.l.b16 %v141
    %v258 = vunpack.c.h.b16 %v141
    %v259 = vpack.c.b16 %v199, %v195
    %v260 = vpack.c.b16 %v200, %v196
    %v261 = vpack.c.b16 %v201, %v197
    %v262 = vpack.c.b16 %v202, %v198
    %v263 = vpack.c.b16 %v207, %v203
    %v264 = vpack.c.b16 %v208, %v204
    %v265 = vpack.c.b16 %v209, %v205
    %v266 = vpack.c.b16 %v210, %v206
    %v267 = vpack.c.b16 %v215, %v211
    %v268 = vpack.c.b16 %v216, %v212
    %v269 = vpack.c.b16 %v217, %v213
    %v270 = vpack.c.b16 %v218, %v214
    %v271 = vpack.c.b16 %v223, %v219
    %v272 = vpack.c.b16 %v224, %v220
    %v273 = vpack.c.b16 %v225, %v221
    %v274 = vpack.c.b16 %v226, %v222
    %v275 = vpack.c.b16 %v231, %v227
    %v276 = vpack.c.b16 %v232, %v228
    %v277 = vpack.c.b16 %v233, %v229
    %v278 = vpack.c.b16 %v234, %v230
    %v279 = vpack.c.b16 %v239, %v235
    %v280 = vpack.c.b16 %v240, %v236
    %v281 = vpack.c.b16 %v241, %v237
    %v282 = vpack.c.b16 %v242, %v238
    %v283 = vpack.c.b16 %v247, %v243
    %v284 = vpack.c.b16 %v248, %v244
    %v285 = vpack.c.b16 %v249, %v245
    %v286 = vpack.c.b16 %v250, %v246
    %v287 = vpack.c.b16 %v255, %v251
    %v288 = vpack.c.b16 %v256, %v252
    %v289 = vpack.c.b16 %v257, %v253
    %v290 = vpack.c.b16 %v258, %v254
    %323 = vmatprep.subr.bf16.mxu0 %v260
    %324 = vmatpush1.bf16.msra.mxu0 %v259
    %325 = vmatprep.subr.bf16.mxu0 %v264
    %326 = vmatpush1.bf16.msra.mxu0 %v263
    %327 = vmatprep.subr.bf16.mxu0 %v268
    %328 = vmatpush1.bf16.msra.mxu0 %v267
    %329 = vmatprep.subr.bf16.mxu0 %v272
    %330 = vmatpush1.bf16.msra.mxu0 %v271
    %331 = vmatprep.subr.bf16.mxu0 %v276
    %332 = vmatpush1.bf16.msra.mxu0 %v275
    %333 = vmatprep.subr.bf16.mxu0 %v280
    %334 = vmatpush1.bf16.msra.mxu0 %v279
    %335 = vmatprep.subr.bf16.mxu0 %v284
    %336 = vmatpush1.bf16.msra.mxu0 %v283
    %337 = vmatprep.subr.bf16.mxu0 %v288
    %338 = vmatpush1.bf16.msra.mxu0 %v287
    %339 = vmatprep.subr.bf16.mxu0 0
    %340 = vmatpush1.bf16.msra.mxu0 0
    %341 = vmatprep.subr.bf16.mxu0 0
    %342 = vmatpush1.bf16.msra.mxu0 0
    %343 = vmatprep.subr.bf16.mxu0 0
    %344 = vmatpush1.bf16.msra.mxu0 0
    %345 = vmatprep.subr.bf16.mxu0 0
    %346 = vmatpush1.bf16.msra.mxu0 0
    %347 = vmatprep.subr.bf16.mxu0 0
    %348 = vmatpush1.bf16.msra.mxu0 0
    %349 = vmatprep.subr.bf16.mxu0 0
    %350 = vmatpush1.bf16.msra.mxu0 0
    %351 = vmatprep.subr.bf16.mxu0 0
    %352 = vmatpush1.bf16.msra.mxu0 0
    %353 = vmatprep.subr.bf16.mxu0 0
    %354 = vmatpush1.bf16.msra.mxu0 0
    %355 = vmatprep.mubr.bf16.mxu0 0
    %356 = vmatmul.mubr.bf16.gmra.mrb[0].mxu0 %v109
    %v357 = vpop.f32.mrb[0].mxu0
    %v358 = vadd.f32 %v146, %v357
    %v359 = vpop.f32.mrb[0].mxu0
    %v360 = vadd.f32 %v150, %v359
    %v361 = vpop.f32.mrb[0].mxu0
    %v362 = vpop.f32.mrb[0].mxu0
    %363 = vdwg.mxu0
    %364 = vmatprep.subr.bf16.mxu0 %v262
    %365 = vmatpush1.bf16.msra.mxu0 %v261
    %366 = vmatprep.subr.bf16.mxu0 %v266
    %367 = vmatpush1.bf16.msra.mxu0 %v265
    %368 = vmatprep.subr.bf16.mxu0 %v270
    %369 = vmatpush1.bf16.msra.mxu0 %v269
    %370 = vmatprep.subr.bf16.mxu0 %v274
    %371 = vmatpush1.bf16.msra.mxu0 %v273
    %372 = vmatprep.subr.bf16.mxu0 %v278
    %373 = vmatpush1.bf16.msra.mxu0 %v277
    %374 = vmatprep.subr.bf16.mxu0 %v282
    %375 = vmatpush1.bf16.msra.mxu0 %v281
    %376 = vmatprep.subr.bf16.mxu0 %v286
    %377 = vmatpush1.bf16.msra.mxu0 %v285
    %378 = vmatprep.subr.bf16.mxu0 %v290
    %379 = vmatpush1.bf16.msra.mxu0 %v289
    %380 = vmatprep.subr.bf16.mxu0 0
    %381 = vmatpush1.bf16.msra.mxu0 0
    %382 = vmatprep.subr.bf16.mxu0 0
    %383 = vmatpush1.bf16.msra.mxu0 0
    %384 = vmatprep.subr.bf16.mxu0 0
    %385 = vmatpush1.bf16.msra.mxu0 0
    %386 = vmatprep.subr.bf16.mxu0 0
    %387 = vmatpush1.bf16.msra.mxu0 0
    %388 = vmatprep.subr.bf16.mxu0 0
    %389 = vmatpush1.bf16.msra.mxu0 0
    %390 = vmatprep.subr.bf16.mxu0 0
    %391 = vmatpush1.bf16.msra.mxu0 0
    %392 = vmatprep.subr.bf16.mxu0 0
    %393 = vmatpush1.bf16.msra.mxu0 0
    %394 = vmatprep.subr.bf16.mxu0 0
    %395 = vmatpush1.bf16.msra.mxu0 0
    %396 = vmatprep.mubr.bf16.mxu0 0
    %397 = vmatmul.mubr.bf16.gmra.mrb[0].mxu0 %v109
    %v398 = vpop.f32.mrb[0].mxu0
    %v399 = vadd.f32 %v154, %v398
    %v400 = vpop.f32.mrb[0].mxu0
    %v401 = vadd.f32 %v158, %v400
    %v402 = vpop.f32.mrb[0].mxu0
    %v403 = vpop.f32.mrb[0].mxu0
    %404 = vdwg.mxu0
    %v405 = vmax.f32 %v358, 0.0
    %v406 = vmax.f32 %v360, 0.0
    %v407 = vmax.f32 %v399, 0.0
    %v408 = vmax.f32 %v401, 0.0
    %s409 = scalar_lea.vmem [#allocation10], 1
    %v410 = vld [vmem:[%s409] ss:$4 sm:$0xf]
    %s411 = scalar_lea.vmem [#allocation10], 2
    %v412 = vld [vmem:[%s411] ss:$4 sm:$0xf]
    %v413 = vrot.slane %v405, 4
    %v414 = vadd.f32 %v405, %v413
    %v415 = vrot.slane %v414, 2
    %v416 = vadd.f32 %v414, %v415
    %v417 = vrot.slane %v416, 1
    %v418 = vadd.f32 %v416, %v417
    %v419 = vrot.slane %v406, 4
    %v420 = vadd.f32 %v406, %v419
    %v421 = vrot.slane %v420, 2
    %v422 = vadd.f32 %v420, %v421
    %v423 = vrot.slane %v422, 1
    %v424 = vadd.f32 %v422, %v423
    %v425 = vrot.slane %v407, 4
    %v426 = vadd.f32 %v407, %v425
    %v427 = vrot.slane %v426, 2
    %v428 = vadd.f32 %v426, %v427
    %v429 = vrot.slane %v428, 1
    %v430 = vadd.f32 %v428, %v429
    %v431 = vrot.slane %v408, 4
    %v432 = vadd.f32 %v408, %v431
    %v433 = vrot.slane %v432, 2
    %v434 = vadd.f32 %v432, %v433
    %v435 = vrot.slane %v434, 1
    %v436 = vadd.f32 %v434, %v435
    %v437 = vrcp.pop 8.0
    %v438 = vmul.f32 %v418, %v437
    %v439 = vmul.f32 %v424, %v437
    %v440 = vmul.f32 %v430, %v437
    %v441 = vmul.f32 %v436, %v437
    %v442 = vsub.f32 %v405, %v438
    %v443 = vsub.f32 %v406, %v439
    %v444 = vsub.f32 %v407, %v440
    %v445 = vsub.f32 %v408, %v441
    %v446 = vmul.f32 %v442, %v442
    %v447 = vmul.f32 %v443, %v443
    %v448 = vmul.f32 %v444, %v444
    %v449 = vmul.f32 %v445, %v445
    %v450 = vrot.slane %v446, 4
    %v451 = vadd.f32 %v446, %v450
    %v452 = vrot.slane %v451, 2
    %v453 = vadd.f32 %v451, %v452
    %v454 = vrot.slane %v453, 1
    %v455 = vadd.f32 %v453, %v454
    %v456 = vrot.slane %v447, 4
    %v457 = vadd.f32 %v447, %v456
    %v458 = vrot.slane %v457, 2
    %v459 = vadd.f32 %v457, %v458
    %v460 = vrot.slane %v459, 1
    %v461 = vadd.f32 %v459, %v460
    %v462 = vrot.slane %v448, 4
    %v463 = vadd.f32 %v448, %v462
    %v464 = vrot.slane %v463, 2
    %v465 = vadd.f32 %v463, %v464
    %v466 = vrot.slane %v465, 1
    %v467 = vadd.f32 %v465, %v466
    %v468 = vrot.slane %v449, 4
    %v469 = vadd.f32 %v449, %v468
    %v470 = vrot.slane %v469, 2
    %v471 = vadd.f32 %v469, %v470
    %v472 = vrot.slane %v471, 1
    %v473 = vadd.f32 %v471, %v472
    %v474 = vmul.f32 %v455, %v437
    %v475 = vmul.f32 %v461, %v437
    %v476 = vmul.f32 %v467, %v437
    %v477 = vmul.f32 %v473, %v437
    %v478 = vadd.f32 %v474, 1e-05
    %v479 = vadd.f32 %v475, 1e-05
    %v480 = vadd.f32 %v476, 1e-05
    %v481 = vadd.f32 %v477, 1e-05
    %v482 = vrsqrt.pop %v478
    %v483 = vrsqrt.pop %v479
    %v484 = vrsqrt.pop %v480
    %v485 = vrsqrt.pop %v481
    %v486 = vmul.f32 %v442, %v482
    %v487 = vmul.f32 %v443, %v483
    %v488 = vmul.f32 %v444, %v484
    %v489 = vmul.f32 %v445, %v485
    %v491 = vlaneseq
    %v492 = vshrl.u32 %v491, 7
    %v493 = vsub.s32 0, %v492
    %v494 = vrot.slane %v410, %v493
    %v495 = vlaneseq
    %v496 = vshrl.u32 %v495, 7
    %v497 = vsub.s32 1, %v496
    %v498 = vrot.slane %v410, %v497
    %v499 = vlaneseq
    %v500 = vshrl.u32 %v499, 7
    %v501 = vsub.s32 2, %v500
    %v502 = vrot.slane %v410, %v501
    %v503 = vlaneseq
    %v504 = vshrl.u32 %v503, 7
    %v505 = vsub.s32 3, %v504
    %v506 = vrot.slane %v410, %v505
    %v511 = vmul.f32 %v486, %v494
    %v512 = vmul.f32 %v487, %v498
    %v513 = vmul.f32 %v488, %v502
    %v514 = vmul.f32 %v489, %v506
    %v516 = vlaneseq
    %v517 = vshrl.u32 %v516, 7
    %v518 = vsub.s32 0, %v517
    %v519 = vrot.slane %v412, %v518
    %v520 = vlaneseq
    %v521 = vshrl.u32 %v520, 7
    %v522 = vsub.s32 1, %v521
    %v523 = vrot.slane %v412, %v522
    %v524 = vlaneseq
    %v525 = vshrl.u32 %v524, 7
    %v526 = vsub.s32 2, %v525
    %v527 = vrot.slane %v412, %v526
    %v528 = vlaneseq
    %v529 = vshrl.u32 %v528, 7
    %v530 = vsub.s32 3, %v529
    %v531 = vrot.slane %v412, %v530
    %v536 = vadd.f32 %v511, %v519
    %v537 = vadd.f32 %v512, %v523
    %v538 = vadd.f32 %v513, %v527
    %v539 = vadd.f32 %v514, %v531
    %s540 = scalar_lea.vmem [#allocation10], 16
    %v541 = vld [vmem:[%s540] ss:$4 sm:$0xf]
    %v542 = vpack.c.bf16 %v536, %v536
    %v543 = vpack.c.bf16 %v537, %v537
    %v544 = vpack.c.bf16 %v538, %v538
    %v545 = vpack.c.bf16 %v539, %v539
    %v546 = vld [vmem:[#allocation4] sm:$0xff]
    %v547 = vld [vmem:[#allocation4 + $0x8] sm:$0xff]
    %v548 = vld [vmem:[#allocation4 + $0x10] sm:$0xff]
    %v549 = vld [vmem:[#allocation4 + $0x18] sm:$0xff]
    %v550 = vld [vmem:[#allocation4 + $0x20] sm:$0xff]
    %v551 = vld [vmem:[#allocation4 + $0x28] sm:$0xff]
    %v552 = vld [vmem:[#allocation4 + $0x30] sm:$0xff]
    %v553 = vld [vmem:[#allocation4 + $0x38] sm:$0xff]
    %v554 = vld [vmem:[#allocation4 + $0x40] sm:$0xff]
    %v555 = vld [vmem:[#allocation4 + $0x48] sm:$0xff]
    %v556 = vld [vmem:[#allocation4 + $0x50] sm:$0xff]
    %v557 = vld [vmem:[#allocation4 + $0x58] sm:$0xff]
    %v558 = vld [vmem:[#allocation4 + $0x60] sm:$0xff]
    %v559 = vld [vmem:[#allocation4 + $0x68] sm:$0xff]
    %v560 = vld [vmem:[#allocation4 + $0x70] sm:$0xff]
    %v561 = vld [vmem:[#allocation4 + $0x78] sm:$0xff]
    %v562 = vld [vmem:[#allocation4 + $0x80] sm:$0xff]
    %v563 = vld [vmem:[#allocation4 + $0x88] sm:$0xff]
    %v564 = vld [vmem:[#allocation4 + $0x90] sm:$0xff]
    %v565 = vld [vmem:[#allocation4 + $0x98] sm:$0xff]
    %v566 = vld [vmem:[#allocation4 + $0xa0] sm:$0xff]
    %v567 = vld [vmem:[#allocation4 + $0xa8] sm:$0xff]
    %v568 = vld [vmem:[#allocation4 + $0xb0] sm:$0xff]
    %v569 = vld [vmem:[#allocation4 + $0xb8] sm:$0xff]
    %v570 = vld [vmem:[#allocation4 + $0xc0] sm:$0xff]
    %v571 = vld [vmem:[#allocation4 + $0xc8] sm:$0xff]
    %v572 = vld [vmem:[#allocation4 + $0xd0] sm:$0xff]
    %v573 = vld [vmem:[#allocation4 + $0xd8] sm:$0xff]
    %v574 = vld [vmem:[#allocation4 + $0xe0] sm:$0xff]
    %v575 = vld [vmem:[#allocation4 + $0xe8] sm:$0xff]
    %v576 = vld [vmem:[#allocation4 + $0xf0] sm:$0xff]
    %v577 = vld [vmem:[#allocation4 + $0xf8] sm:$0xff]
    %v578 = vld [vmem:[#allocation4 + $0x100] sm:$0xff]
    %v579 = vld [vmem:[#allocation4 + $0x108] sm:$0xff]
    %v580 = vld [vmem:[#allocation4 + $0x110] sm:$0xff]
    %v581 = vld [vmem:[#allocation4 + $0x118] sm:$0xff]
    %v582 = vld [vmem:[#allocation4 + $0x120] sm:$0xff]
    %v583 = vld [vmem:[#allocation4 + $0x128] sm:$0xff]
    %v584 = vld [vmem:[#allocation4 + $0x130] sm:$0xff]
    %v585 = vld [vmem:[#allocation4 + $0x138] sm:$0xff]
    %v586 = vld [vmem:[#allocation4 + $0x140] sm:$0xff]
    %v587 = vld [vmem:[#allocation4 + $0x148] sm:$0xff]
    %v588 = vld [vmem:[#allocation4 + $0x150] sm:$0xff]
    %v589 = vld [vmem:[#allocation4 + $0x158] sm:$0xff]
    %v590 = vld [vmem:[#allocation4 + $0x160] sm:$0xff]
    %v591 = vld [vmem:[#allocation4 + $0x168] sm:$0xff]
    %v592 = vld [vmem:[#allocation4 + $0x170] sm:$0xff]
    %v593 = vld [vmem:[#allocation4 + $0x178] sm:$0xff]
    %v594 = vld [vmem:[#allocation4 + $0x180] sm:$0xff]
    %v595 = vld [vmem:[#allocation4 + $0x188] sm:$0xff]
    %v596 = vld [vmem:[#allocation4 + $0x190] sm:$0xff]
    %v597 = vld [vmem:[#allocation4 + $0x198] sm:$0xff]
    %v598 = vld [vmem:[#allocation4 + $0x1a0] sm:$0xff]
    %v599 = vld [vmem:[#allocation4 + $0x1a8] sm:$0xff]
    %v600 = vld [vmem:[#allocation4 + $0x1b0] sm:$0xff]
    %v601 = vld [vmem:[#allocation4 + $0x1b8] sm:$0xff]
    %v602 = vld [vmem:[#allocation4 + $0x1c0] sm:$0xff]
    %v603 = vld [vmem:[#allocation4 + $0x1c8] sm:$0xff]
    %v604 = vld [vmem:[#allocation4 + $0x1d0] sm:$0xff]
    %v605 = vld [vmem:[#allocation4 + $0x1d8] sm:$0xff]
    %v606 = vld [vmem:[#allocation4 + $0x1e0] sm:$0xff]
    %v607 = vld [vmem:[#allocation4 + $0x1e8] sm:$0xff]
    %v608 = vld [vmem:[#allocation4 + $0x1f0] sm:$0xff]
    %v609 = vld [vmem:[#allocation4 + $0x1f8] sm:$0xff]
    %v610 = vld [vmem:[#allocation4 + $0x200] sm:$0xff]
    %v611 = vld [vmem:[#allocation4 + $0x208] sm:$0xff]
    %v612 = vld [vmem:[#allocation4 + $0x210] sm:$0xff]
    %v613 = vld [vmem:[#allocation4 + $0x218] sm:$0xff]
    %v614 = vld [vmem:[#allocation4 + $0x220] sm:$0xff]
    %v615 = vld [vmem:[#allocation4 + $0x228] sm:$0xff]
    %v616 = vld [vmem:[#allocation4 + $0x230] sm:$0xff]
    %v617 = vld [vmem:[#allocation4 + $0x238] sm:$0xff]
    %v618 = vld [vmem:[#allocation4 + $0x240] sm:$0xff]
    %v619 = vld [vmem:[#allocation4 + $0x248] sm:$0xff]
    %v620 = vld [vmem:[#allocation4 + $0x250] sm:$0xff]
    %v621 = vld [vmem:[#allocation4 + $0x258] sm:$0xff]
    %v622 = vld [vmem:[#allocation4 + $0x260] sm:$0xff]
    %v623 = vld [vmem:[#allocation4 + $0x268] sm:$0xff]
    %v624 = vld [vmem:[#allocation4 + $0x270] sm:$0xff]
    %v625 = vld [vmem:[#allocation4 + $0x278] sm:$0xff]
    %v626 = vld [vmem:[#allocation4 + $0x280] sm:$0xff]
    %v627 = vld [vmem:[#allocation4 + $0x288] sm:$0xff]
    %v628 = vld [vmem:[#allocation4 + $0x290] sm:$0xff]
    %v629 = vld [vmem:[#allocation4 + $0x298] sm:$0xff]
    %v630 = vld [vmem:[#allocation4 + $0x2a0] sm:$0xff]
    %v631 = vld [vmem:[#allocation4 + $0x2a8] sm:$0xff]
    %v632 = vld [vmem:[#allocation4 + $0x2b0] sm:$0xff]
    %v633 = vld [vmem:[#allocation4 + $0x2b8] sm:$0xff]
    %v634 = vld [vmem:[#allocation4 + $0x2c0] sm:$0xff]
    %v635 = vld [vmem:[#allocation4 + $0x2c8] sm:$0xff]
    %v636 = vld [vmem:[#allocation4 + $0x2d0] sm:$0xff]
    %v637 = vld [vmem:[#allocation4 + $0x2d8] sm:$0xff]
    %v638 = vld [vmem:[#allocation4 + $0x2e0] sm:$0xff]
    %v639 = vld [vmem:[#allocation4 + $0x2e8] sm:$0xff]
    %v640 = vld [vmem:[#allocation4 + $0x2f0] sm:$0xff]
    %v641 = vld [vmem:[#allocation4 + $0x2f8] sm:$0xff]
    %v642 = vld [vmem:[#allocation4 + $0x300] sm:$0xff]
    %v643 = vld [vmem:[#allocation4 + $0x308] sm:$0xff]
    %v644 = vld [vmem:[#allocation4 + $0x310] sm:$0xff]
    %v645 = vld [vmem:[#allocation4 + $0x318] sm:$0xff]
    %v646 = vld [vmem:[#allocation4 + $0x320] sm:$0xff]
    %v647 = vld [vmem:[#allocation4 + $0x328] sm:$0xff]
    %v648 = vld [vmem:[#allocation4 + $0x330] sm:$0xff]
    %v649 = vld [vmem:[#allocation4 + $0x338] sm:$0xff]
    %v650 = vld [vmem:[#allocation4 + $0x340] sm:$0xff]
    %v651 = vld [vmem:[#allocation4 + $0x348] sm:$0xff]
    %v652 = vld [vmem:[#allocation4 + $0x350] sm:$0xff]
    %v653 = vld [vmem:[#allocation4 + $0x358] sm:$0xff]
    %v654 = vld [vmem:[#allocation4 + $0x360] sm:$0xff]
    %v655 = vld [vmem:[#allocation4 + $0x368] sm:$0xff]
    %v656 = vld [vmem:[#allocation4 + $0x370] sm:$0xff]
    %v657 = vld [vmem:[#allocation4 + $0x378] sm:$0xff]
    %v658 = vld [vmem:[#allocation4 + $0x380] sm:$0xff]
    %v659 = vld [vmem:[#allocation4 + $0x388] sm:$0xff]
    %v660 = vld [vmem:[#allocation4 + $0x390] sm:$0xff]
    %v661 = vld [vmem:[#allocation4 + $0x398] sm:$0xff]
    %v662 = vld [vmem:[#allocation4 + $0x3a0] sm:$0xff]
    %v663 = vld [vmem:[#allocation4 + $0x3a8] sm:$0xff]
    %v664 = vld [vmem:[#allocation4 + $0x3b0] sm:$0xff]
    %v665 = vld [vmem:[#allocation4 + $0x3b8] sm:$0xff]
    %v666 = vld [vmem:[#allocation4 + $0x3c0] sm:$0xff]
    %v667 = vld [vmem:[#allocation4 + $0x3c8] sm:$0xff]
    %v668 = vld [vmem:[#allocation4 + $0x3d0] sm:$0xff]
    %v669 = vld [vmem:[#allocation4 + $0x3d8] sm:$0xff]
    %v670 = vld [vmem:[#allocation4 + $0x3e0] sm:$0xff]
    %v671 = vld [vmem:[#allocation4 + $0x3e8] sm:$0xff]
    %v672 = vld [vmem:[#allocation4 + $0x3f0] sm:$0xff]
    %v673 = vld [vmem:[#allocation4 + $0x3f8] sm:$0xff]
    %v675 = vlaneseq
    %v676 = vshrl.u32 %v675, 7
    %v677 = vsub.s32 0, %v676
    %v678 = vrot.slane %v541, %v677
    %v679 = vlaneseq
    %v680 = vshrl.u32 %v679, 7
    %v681 = vsub.s32 1, %v680
    %v682 = vrot.slane %v541, %v681
    %v683 = vlaneseq
    %v684 = vshrl.u32 %v683, 7
    %v685 = vsub.s32 2, %v684
    %v686 = vrot.slane %v541, %v685
    %v687 = vlaneseq
    %v688 = vshrl.u32 %v687, 7
    %v689 = vsub.s32 3, %v688
    %v690 = vrot.slane %v541, %v689
    %v823 = vunpack.c.l.b16 %v546
    %v824 = vunpack.c.h.b16 %v546
    %v825 = vunpack.c.l.b16 %v547
    %v826 = vunpack.c.h.b16 %v547
    %v827 = vunpack.c.l.b16 %v548
    %v828 = vunpack.c.h.b16 %v548
    %v829 = vunpack.c.l.b16 %v549
    %v830 = vunpack.c.h.b16 %v549
    %v831 = vunpack.c.l.b16 %v550
    %v832 = vunpack.c.h.b16 %v550
    %v833 = vunpack.c.l.b16 %v551
    %v834 = vunpack.c.h.b16 %v551
    %v835 = vunpack.c.l.b16 %v552
    %v836 = vunpack.c.h.b16 %v552
    %v837 = vunpack.c.l.b16 %v553
    %v838 = vunpack.c.h.b16 %v553
    %v839 = vunpack.c.l.b16 %v554
    %v840 = vunpack.c.h.b16 %v554
    %v841 = vunpack.c.l.b16 %v555
    %v842 = vunpack.c.h.b16 %v555
    %v843 = vunpack.c.l.b16 %v556
    %v844 = vunpack.c.h.b16 %v556
    %v845 = vunpack.c.l.b16 %v557
    %v846 = vunpack.c.h.b16 %v557
    %v847 = vunpack.c.l.b16 %v558
    %v848 = vunpack.c.h.b16 %v558
    %v849 = vunpack.c.l.b16 %v559
    %v850 = vunpack.c.h.b16 %v559
    %v851 = vunpack.c.l.b16 %v560
    %v852 = vunpack.c.h.b16 %v560
    %v853 = vunpack.c.l.b16 %v561
    %v854 = vunpack.c.h.b16 %v561
    %v855 = vunpack.c.l.b16 %v562
    %v856 = vunpack.c.h.b16 %v562
    %v857 = vunpack.c.l.b16 %v563
    %v858 = vunpack.c.h.b16 %v563
    %v859 = vunpack.c.l.b16 %v564
    %v860 = vunpack.c.h.b16 %v564
    %v861 = vunpack.c.l.b16 %v565
    %v862 = vunpack.c.h.b16 %v565
    %v863 = vunpack.c.l.b16 %v566
    %v864 = vunpack.c.h.b16 %v566
    %v865 = vunpack.c.l.b16 %v567
    %v866 = vunpack.c.h.b16 %v567
    %v867 = vunpack.c.l.b16 %v568
    %v868 = vunpack.c.h.b16 %v568
    %v869 = vunpack.c.l.b16 %v569
    %v870 = vunpack.c.h.b16 %v569
    %v871 = vunpack.c.l.b16 %v570
    %v872 = vunpack.c.h.b16 %v570
    %v873 = vunpack.c.l.b16 %v571
    %v874 = vunpack.c.h.b16 %v571
    %v875 = vunpack.c.l.b16 %v572
    %v876 = vunpack.c.h.b16 %v572
    %v877 = vunpack.c.l.b16 %v573
    %v878 = vunpack.c.h.b16 %v573
    %v879 = vunpack.c.l.b16 %v574
    %v880 = vunpack.c.h.b16 %v574
    %v881 = vunpack.c.l.b16 %v575
    %v882 = vunpack.c.h.b16 %v575
    %v883 = vunpack.c.l.b16 %v576
    %v884 = vunpack.c.h.b16 %v576
    %v885 = vunpack.c.l.b16 %v577
    %v886 = vunpack.c.h.b16 %v577
    %v887 = vunpack.c.l.b16 %v578
    %v888 = vunpack.c.h.b16 %v578
    %v889 = vunpack.c.l.b16 %v579
    %v890 = vunpack.c.h.b16 %v579
    %v891 = vunpack.c.l.b16 %v580
    %v892 = vunpack.c.h.b16 %v580
    %v893 = vunpack.c.l.b16 %v581
    %v894 = vunpack.c.h.b16 %v581
    %v895 = vunpack.c.l.b16 %v582
    %v896 = vunpack.c.h.b16 %v582
    %v897 = vunpack.c.l.b16 %v583
    %v898 = vunpack.c.h.b16 %v583
    %v899 = vunpack.c.l.b16 %v584
    %v900 = vunpack.c.h.b16 %v584
    %v901 = vunpack.c.l.b16 %v585
    %v902 = vunpack.c.h.b16 %v585
    %v903 = vunpack.c.l.b16 %v586
    %v904 = vunpack.c.h.b16 %v586
    %v905 = vunpack.c.l.b16 %v587
    %v906 = vunpack.c.h.b16 %v587
    %v907 = vunpack.c.l.b16 %v588
    %v908 = vunpack.c.h.b16 %v588
    %v909 = vunpack.c.l.b16 %v589
    %v910 = vunpack.c.h.b16 %v589
    %v911 = vunpack.c.l.b16 %v590
    %v912 = vunpack.c.h.b16 %v590
    %v913 = vunpack.c.l.b16 %v591
    %v914 = vunpack.c.h.b16 %v591
    %v915 = vunpack.c.l.b16 %v592
    %v916 = vunpack.c.h.b16 %v592
    %v917 = vunpack.c.l.b16 %v593
    %v918 = vunpack.c.h.b16 %v593
    %v919 = vunpack.c.l.b16 %v594
    %v920 = vunpack.c.h.b16 %v594
    %v921 = vunpack.c.l.b16 %v595
    %v922 = vunpack.c.h.b16 %v595
    %v923 = vunpack.c.l.b16 %v596
    %v924 = vunpack.c.h.b16 %v596
    %v925 = vunpack.c.l.b16 %v597
    %v926 = vunpack.c.h.b16 %v597
    %v927 = vunpack.c.l.b16 %v598
    %v928 = vunpack.c.h.b16 %v598
    %v929 = vunpack.c.l.b16 %v599
    %v930 = vunpack.c.h.b16 %v599
    %v931 = vunpack.c.l.b16 %v600
    %v932 = vunpack.c.h.b16 %v600
    %v933 = vunpack.c.l.b16 %v601
    %v934 = vunpack.c.h.b16 %v601
    %v935 = vunpack.c.l.b16 %v602
    %v936 = vunpack.c.h.b16 %v602
    %v937 = vunpack.c.l.b16 %v603
    %v938 = vunpack.c.h.b16 %v603
    %v939 = vunpack.c.l.b16 %v604
    %v940 = vunpack.c.h.b16 %v604
    %v941 = vunpack.c.l.b16 %v605
    %v942 = vunpack.c.h.b16 %v605
    %v943 = vunpack.c.l.b16 %v606
    %v944 = vunpack.c.h.b16 %v606
    %v945 = vunpack.c.l.b16 %v607
    %v946 = vunpack.c.h.b16 %v607
    %v947 = vunpack.c.l.b16 %v608
    %v948 = vunpack.c.h.b16 %v608
    %v949 = vunpack.c.l.b16 %v609
    %v950 = vunpack.c.h.b16 %v609
    %v951 = vunpack.c.l.b16 %v610
    %v952 = vunpack.c.h.b16 %v610
    %v953 = vunpack.c.l.b16 %v611
    %v954 = vunpack.c.h.b16 %v611
    %v955 = vunpack.c.l.b16 %v612
    %v956 = vunpack.c.h.b16 %v612
    %v957 = vunpack.c.l.b16 %v613
    %v958 = vunpack.c.h.b16 %v613
    %v959 = vunpack.c.l.b16 %v614
    %v960 = vunpack.c.h.b16 %v614
    %v961 = vunpack.c.l.b16 %v615
    %v962 = vunpack.c.h.b16 %v615
    %v963 = vunpack.c.l.b16 %v616
    %v964 = vunpack.c.h.b16 %v616
    %v965 = vunpack.c.l.b16 %v617
    %v966 = vunpack.c.h.b16 %v617
    %v967 = vunpack.c.l.b16 %v618
    %v968 = vunpack.c.h.b16 %v618
    %v969 = vunpack.c.l.b16 %v619
    %v970 = vunpack.c.h.b16 %v619
    %v971 = vunpack.c.l.b16 %v620
    %v972 = vunpack.c.h.b16 %v620
    %v973 = vunpack.c.l.b16 %v621
    %v974 = vunpack.c.h.b16 %v621
    %v975 = vunpack.c.l.b16 %v622
    %v976 = vunpack.c.h.b16 %v622
    %v977 = vunpack.c.l.b16 %v623
    %v978 = vunpack.c.h.b16 %v623
    %v979 = vunpack.c.l.b16 %v624
    %v980 = vunpack.c.h.b16 %v624
    %v981 = vunpack.c.l.b16 %v625
    %v982 = vunpack.c.h.b16 %v625
    %v983 = vunpack.c.l.b16 %v626
    %v984 = vunpack.c.h.b16 %v626
    %v985 = vunpack.c.l.b16 %v627
    %v986 = vunpack.c.h.b16 %v627
    %v987 = vunpack.c.l.b16 %v628
    %v988 = vunpack.c.h.b16 %v628
    %v989 = vunpack.c.l.b16 %v629
    %v990 = vunpack.c.h.b16 %v629
    %v991 = vunpack.c.l.b16 %v630
    %v992 = vunpack.c.h.b16 %v630
    %v993 = vunpack.c.l.b16 %v631
    %v994 = vunpack.c.h.b16 %v631
    %v995 = vunpack.c.l.b16 %v632
    %v996 = vunpack.c.h.b16 %v632
    %v997 = vunpack.c.l.b16 %v633
    %v998 = vunpack.c.h.b16 %v633
    %v999 = vunpack.c.l.b16 %v634
    %v1000 = vunpack.c.h.b16 %v634
    %v1001 = vunpack.c.l.b16 %v635
    %v1002 = vunpack.c.h.b16 %v635
    %v1003 = vunpack.c.l.b16 %v636
    %v1004 = vunpack.c.h.b16 %v636
    %v1005 = vunpack.c.l.b16 %v637
    %v1006 = vunpack.c.h.b16 %v637
    %v1007 = vunpack.c.l.b16 %v638
    %v1008 = vunpack.c.h.b16 %v638
    %v1009 = vunpack.c.l.b16 %v639
    %v1010 = vunpack.c.h.b16 %v639
    %v1011 = vunpack.c.l.b16 %v640
    %v1012 = vunpack.c.h.b16 %v640
    %v1013 = vunpack.c.l.b16 %v641
    %v1014 = vunpack.c.h.b16 %v641
    %v1015 = vunpack.c.l.b16 %v642
    %v1016 = vunpack.c.h.b16 %v642
    %v1017 = vunpack.c.l.b16 %v643
    %v1018 = vunpack.c.h.b16 %v643
    %v1019 = vunpack.c.l.b16 %v644
    %v1020 = vunpack.c.h.b16 %v644
    %v1021 = vunpack.c.l.b16 %v645
    %v1022 = vunpack.c.h.b16 %v645
    %v1023 = vunpack.c.l.b16 %v646
    %v1024 = vunpack.c.h.b16 %v646
    %v1025 = vunpack.c.l.b16 %v647
    %v1026 = vunpack.c.h.b16 %v647
    %v1027 = vunpack.c.l.b16 %v648
    %v1028 = vunpack.c.h.b16 %v648
    %v1029 = vunpack.c.l.b16 %v649
    %v1030 = vunpack.c.h.b16 %v649
    %v1031 = vunpack.c.l.b16 %v650
    %v1032 = vunpack.c.h.b16 %v650
    %v1033 = vunpack.c.l.b16 %v651
    %v1034 = vunpack.c.h.b16 %v651
    %v1035 = vunpack.c.l.b16 %v652
    %v1036 = vunpack.c.h.b16 %v652
    %v1037 = vunpack.c.l.b16 %v653
    %v1038 = vunpack.c.h.b16 %v653
    %v1039 = vunpack.c.l.b16 %v654
    %v1040 = vunpack.c.h.b16 %v654
    %v1041 = vunpack.c.l.b16 %v655
    %v1042 = vunpack.c.h.b16 %v655
    %v1043 = vunpack.c.l.b16 %v656
    %v1044 = vunpack.c.h.b16 %v656
    %v1045 = vunpack.c.l.b16 %v657
    %v1046 = vunpack.c.h.b16 %v657
    %v1047 = vunpack.c.l.b16 %v658
    %v1048 = vunpack.c.h.b16 %v658
    %v1049 = vunpack.c.l.b16 %v659
    %v1050 = vunpack.c.h.b16 %v659
    %v1051 = vunpack.c.l.b16 %v660
    %v1052 = vunpack.c.h.b16 %v660
    %v1053 = vunpack.c.l.b16 %v661
    %v1054 = vunpack.c.h.b16 %v661
    %v1055 = vunpack.c.l.b16 %v662
    %v1056 = vunpack.c.h.b16 %v662
    %v1057 = vunpack.c.l.b16 %v663
    %v1058 = vunpack.c.h.b16 %v663
    %v1059 = vunpack.c.l.b16 %v664
    %v1060 = vunpack.c.h.b16 %v664
    %v1061 = vunpack.c.l.b16 %v665
    %v1062 = vunpack.c.h.b16 %v665
    %v1063 = vunpack.c.l.b16 %v666
    %v1064 = vunpack.c.h.b16 %v666
    %v1065 = vunpack.c.l.b16 %v667
    %v1066 = vunpack.c.h.b16 %v667
    %v1067 = vunpack.c.l.b16 %v668
    %v1068 = vunpack.c.h.b16 %v668
    %v1069 = vunpack.c.l.b16 %v669
    %v1070 = vunpack.c.h.b16 %v669
    %v1071 = vunpack.c.l.b16 %v670
    %v1072 = vunpack.c.h.b16 %v670
    %v1073 = vunpack.c.l.b16 %v671
    %v1074 = vunpack.c.h.b16 %v671
    %v1075 = vunpack.c.l.b16 %v672
    %v1076 = vunpack.c.h.b16 %v672
    %v1077 = vunpack.c.l.b16 %v673
    %v1078 = vunpack.c.h.b16 %v673
    %v1079 = vpack.c.b16 %v827, %v823
    %v1080 = vpack.c.b16 %v828, %v824
    %v1081 = vpack.c.b16 %v829, %v825
    %v1082 = vpack.c.b16 %v830, %v826
    %v1083 = vpack.c.b16 %v835, %v831
    %v1084 = vpack.c.b16 %v836, %v832
    %v1085 = vpack.c.b16 %v837, %v833
    %v1086 = vpack.c.b16 %v838, %v834
    %v1087 = vpack.c.b16 %v843, %v839
    %v1088 = vpack.c.b16 %v844, %v840
    %v1089 = vpack.c.b16 %v845, %v841
    %v1090 = vpack.c.b16 %v846, %v842
    %v1091 = vpack.c.b16 %v851, %v847
    %v1092 = vpack.c.b16 %v852, %v848
    %v1093 = vpack.c.b16 %v853, %v849
    %v1094 = vpack.c.b16 %v854, %v850
    %v1095 = vpack.c.b16 %v859, %v855
    %v1096 = vpack.c.b16 %v860, %v856
    %v1097 = vpack.c.b16 %v861, %v857
    %v1098 = vpack.c.b16 %v862, %v858
    %v1099 = vpack.c.b16 %v867, %v863
    %v1100 = vpack.c.b16 %v868, %v864
    %v1101 = vpack.c.b16 %v869, %v865
    %v1102 = vpack.c.b16 %v870, %v866
    %v1103 = vpack.c.b16 %v875, %v871
    %v1104 = vpack.c.b16 %v876, %v872
    %v1105 = vpack.c.b16 %v877, %v873
    %v1106 = vpack.c.b16 %v878, %v874
    %v1107 = vpack.c.b16 %v883, %v879
    %v1108 = vpack.c.b16 %v884, %v880
    %v1109 = vpack.c.b16 %v885, %v881
    %v1110 = vpack.c.b16 %v886, %v882
    %v1111 = vpack.c.b16 %v891, %v887
    %v1112 = vpack.c.b16 %v892, %v888
    %v1113 = vpack.c.b16 %v893, %v889
    %v1114 = vpack.c.b16 %v894, %v890
    %v1115 = vpack.c.b16 %v899, %v895
    %v1116 = vpack.c.b16 %v900, %v896
    %v1117 = vpack.c.b16 %v901, %v897
    %v1118 = vpack.c.b16 %v902, %v898
    %v1119 = vpack.c.b16 %v907, %v903
    %v1120 = vpack.c.b16 %v908, %v904
    %v1121 = vpack.c.b16 %v909, %v905
    %v1122 = vpack.c.b16 %v910, %v906
    %v1123 = vpack.c.b16 %v915, %v911
    %v1124 = vpack.c.b16 %v916, %v912
    %v1125 = vpack.c.b16 %v917, %v913
    %v1126 = vpack.c.b16 %v918, %v914
    %v1127 = vpack.c.b16 %v923, %v919
    %v1128 = vpack.c.b16 %v924, %v920
    %v1129 = vpack.c.b16 %v925, %v921
    %v1130 = vpack.c.b16 %v926, %v922
    %v1131 = vpack.c.b16 %v931, %v927
    %v1132 = vpack.c.b16 %v932, %v928
    %v1133 = vpack.c.b16 %v933, %v929
    %v1134 = vpack.c.b16 %v934, %v930
    %v1135 = vpack.c.b16 %v939, %v935
    %v1136 = vpack.c.b16 %v940, %v936
    %v1137 = vpack.c.b16 %v941, %v937
    %v1138 = vpack.c.b16 %v942, %v938
    %v1139 = vpack.c.b16 %v947, %v943
    %v1140 = vpack.c.b16 %v948, %v944
    %v1141 = vpack.c.b16 %v949, %v945
    %v1142 = vpack.c.b16 %v950, %v946
    %v1143 = vpack.c.b16 %v955, %v951
    %v1144 = vpack.c.b16 %v956, %v952
    %v1145 = vpack.c.b16 %v957, %v953
    %v1146 = vpack.c.b16 %v958, %v954
    %v1147 = vpack.c.b16 %v963, %v959
    %v1148 = vpack.c.b16 %v964, %v960
    %v1149 = vpack.c.b16 %v965, %v961
    %v1150 = vpack.c.b16 %v966, %v962
    %v1151 = vpack.c.b16 %v971, %v967
    %v1152 = vpack.c.b16 %v972, %v968
    %v1153 = vpack.c.b16 %v973, %v969
    %v1154 = vpack.c.b16 %v974, %v970
    %v1155 = vpack.c.b16 %v979, %v975
    %v1156 = vpack.c.b16 %v980, %v976
    %v1157 = vpack.c.b16 %v981, %v977
    %v1158 = vpack.c.b16 %v982, %v978
    %v1159 = vpack.c.b16 %v987, %v983
    %v1160 = vpack.c.b16 %v988, %v984
    %v1161 = vpack.c.b16 %v989, %v985
    %v1162 = vpack.c.b16 %v990, %v986
    %v1163 = vpack.c.b16 %v995, %v991
    %v1164 = vpack.c.b16 %v996, %v992
    %v1165 = vpack.c.b16 %v997, %v993
    %v1166 = vpack.c.b16 %v998, %v994
    %v1167 = vpack.c.b16 %v1003, %v999
    %v1168 = vpack.c.b16 %v1004, %v1000
    %v1169 = vpack.c.b16 %v1005, %v1001
    %v1170 = vpack.c.b16 %v1006, %v1002
    %v1171 = vpack.c.b16 %v1011, %v1007
    %v1172 = vpack.c.b16 %v1012, %v1008
    %v1173 = vpack.c.b16 %v1013, %v1009
    %v1174 = vpack.c.b16 %v1014, %v1010
    %v1175 = vpack.c.b16 %v1019, %v1015
    %v1176 = vpack.c.b16 %v1020, %v1016
    %v1177 = vpack.c.b16 %v1021, %v1017
    %v1178 = vpack.c.b16 %v1022, %v1018
    %v1179 = vpack.c.b16 %v1027, %v1023
    %v1180 = vpack.c.b16 %v1028, %v1024
    %v1181 = vpack.c.b16 %v1029, %v1025
    %v1182 = vpack.c.b16 %v1030, %v1026
    %v1183 = vpack.c.b16 %v1035, %v1031
    %v1184 = vpack.c.b16 %v1036, %v1032
    %v1185 = vpack.c.b16 %v1037, %v1033
    %v1186 = vpack.c.b16 %v1038, %v1034
    %v1187 = vpack.c.b16 %v1043, %v1039
    %v1188 = vpack.c.b16 %v1044, %v1040
    %v1189 = vpack.c.b16 %v1045, %v1041
    %v1190 = vpack.c.b16 %v1046, %v1042
    %v1191 = vpack.c.b16 %v1051, %v1047
    %v1192 = vpack.c.b16 %v1052, %v1048
    %v1193 = vpack.c.b16 %v1053, %v1049
    %v1194 = vpack.c.b16 %v1054, %v1050
    %v1195 = vpack.c.b16 %v1059, %v1055
    %v1196 = vpack.c.b16 %v1060, %v1056
    %v1197 = vpack.c.b16 %v1061, %v1057
    %v1198 = vpack.c.b16 %v1062, %v1058
    %v1199 = vpack.c.b16 %v1067, %v1063
    %v1200 = vpack.c.b16 %v1068, %v1064
    %v1201 = vpack.c.b16 %v1069, %v1065
    %v1202 = vpack.c.b16 %v1070, %v1066
    %v1203 = vpack.c.b16 %v1075, %v1071
    %v1204 = vpack.c.b16 %v1076, %v1072
    %v1205 = vpack.c.b16 %v1077, %v1073
    %v1206 = vpack.c.b16 %v1078, %v1074
    %1335 = vmatprep.subr.bf16.mxu0 %v1080
    %1336 = vmatpush1.bf16.msra.mxu0 %v1079
    %1337 = vmatprep.subr.bf16.mxu0 %v1084
    %1338 = vmatpush1.bf16.msra.mxu0 %v1083
    %1339 = vmatprep.subr.bf16.mxu0 %v1088
    %1340 = vmatpush1.bf16.msra.mxu0 %v1087
    %1341 = vmatprep.subr.bf16.mxu0 %v1092
    %1342 = vmatpush1.bf16.msra.mxu0 %v1091
    %1343 = vmatprep.subr.bf16.mxu0 %v1096
    %1344 = vmatpush1.bf16.msra.mxu0 %v1095
    %1345 = vmatprep.subr.bf16.mxu0 %v1100
    %1346 = vmatpush1.bf16.msra.mxu0 %v1099
    %1347 = vmatprep.subr.bf16.mxu0 %v1104
    %1348 = vmatpush1.bf16.msra.mxu0 %v1103
    %1349 = vmatprep.subr.bf16.mxu0 %v1108
    %1350 = vmatpush1.bf16.msra.mxu0 %v1107
    %1351 = vmatprep.subr.bf16.mxu0 %v1112
    %1352 = vmatpush1.bf16.msra.mxu0 %v1111
    %1353 = vmatprep.subr.bf16.mxu0 %v1116
    %1354 = vmatpush1.bf16.msra.mxu0 %v1115
    %1355 = vmatprep.subr.bf16.mxu0 %v1120
    %1356 = vmatpush1.bf16.msra.mxu0 %v1119
    %1357 = vmatprep.subr.bf16.mxu0 %v1124
    %1358 = vmatpush1.bf16.msra.mxu0 %v1123
    %1359 = vmatprep.subr.bf16.mxu0 %v1128
    %1360 = vmatpush1.bf16.msra.mxu0 %v1127
    %1361 = vmatprep.subr.bf16.mxu0 %v1132
    %1362 = vmatpush1.bf16.msra.mxu0 %v1131
    %1363 = vmatprep.subr.bf16.mxu0 %v1136
    %1364 = vmatpush1.bf16.msra.mxu0 %v1135
    %1365 = vmatprep.subr.bf16.mxu0 %v1140
    %1366 = vmatpush1.bf16.msra.mxu0 %v1139
    %1367 = vmatprep.mubr.bf16.mxu0 %v543
    %1368 = vmatmul.mubr.bf16.gmra.mrb[0].mxu0 %v542
    %v1369 = vpop.f32.mrb[0].mxu0
    %v1370 = vadd.f32 %v678, %v1369
    %v1371 = vpop.f32.mrb[0].mxu0
    %v1372 = vadd.f32 %v682, %v1371
    %v1373 = vpop.f32.mrb[0].mxu0
    %v1374 = vpop.f32.mrb[0].mxu0
    %1375 = vdwg.mxu0
    %1376 = vmatprep.subr.bf16.mxu0 %v1144
    %1377 = vmatpush1.bf16.msra.mxu0 %v1143
    %1378 = vmatprep.subr.bf16.mxu0 %v1148
    %1379 = vmatpush1.bf16.msra.mxu0 %v1147
    %1380 = vmatprep.subr.bf16.mxu0 %v1152
    %1381 = vmatpush1.bf16.msra.mxu0 %v1151
    %1382 = vmatprep.subr.bf16.mxu0 %v1156
    %1383 = vmatpush1.bf16.msra.mxu0 %v1155
    %1384 = vmatprep.subr.bf16.mxu0 %v1160
    %1385 = vmatpush1.bf16.msra.mxu0 %v1159
    %1386 = vmatprep.subr.bf16.mxu0 %v1164
    %1387 = vmatpush1.bf16.msra.mxu0 %v1163
    %1388 = vmatprep.subr.bf16.mxu0 %v1168
    %1389 = vmatpush1.bf16.msra.mxu0 %v1167
    %1390 = vmatprep.subr.bf16.mxu0 %v1172
    %1391 = vmatpush1.bf16.msra.mxu0 %v1171
    %1392 = vmatprep.subr.bf16.mxu0 %v1176
    %1393 = vmatpush1.bf16.msra.mxu0 %v1175
    %1394 = vmatprep.subr.bf16.mxu0 %v1180
    %1395 = vmatpush1.bf16.msra.mxu0 %v1179
    %1396 = vmatprep.subr.bf16.mxu0 %v1184
    %1397 = vmatpush1.bf16.msra.mxu0 %v1183
    %1398 = vmatprep.subr.bf16.mxu0 %v1188
    %1399 = vmatpush1.bf16.msra.mxu0 %v1187
    %1400 = vmatprep.subr.bf16.mxu0 %v1192
    %1401 = vmatpush1.bf16.msra.mxu0 %v1191
    %1402 = vmatprep.subr.bf16.mxu0 %v1196
    %1403 = vmatpush1.bf16.msra.mxu0 %v1195
    %1404 = vmatprep.subr.bf16.mxu0 %v1200
    %1405 = vmatpush1.bf16.msra.mxu0 %v1199
    %1406 = vmatprep.subr.bf16.mxu0 %v1204
    %1407 = vmatpush1.bf16.msra.mxu0 %v1203
    %1408 = vmatprep.mubr.bf16.mxu0 %v545
    %1409 = vmatmul.mubr.bf16.gmra.mrb[0].mxu0 %v544
    %v1410 = vpop.f32.mrb[0].mxu0
    %v1411 = vadd.f32 %v1370, %v1410
    %v1412 = vpop.f32.mrb[0].mxu0
    %v1413 = vadd.f32 %v1372, %v1412
    %v1414 = vpop.f32.mrb[0].mxu0
    %v1415 = vpop.f32.mrb[0].mxu0
    %1416 = vdwg.mxu0
    %1417 = vmatprep.subr.bf16.mxu0 %v1082
    %1418 = vmatpush1.bf16.msra.mxu0 %v1081
    %1419 = vmatprep.subr.bf16.mxu0 %v1086
    %1420 = vmatpush1.bf16.msra.mxu0 %v1085
    %1421 = vmatprep.subr.bf16.mxu0 %v1090
    %1422 = vmatpush1.bf16.msra.mxu0 %v1089
    %1423 = vmatprep.subr.bf16.mxu0 %v1094
    %1424 = vmatpush1.bf16.msra.mxu0 %v1093
    %1425 = vmatprep.subr.bf16.mxu0 %v1098
    %1426 = vmatpush1.bf16.msra.mxu0 %v1097
    %1427 = vmatprep.subr.bf16.mxu0 %v1102
    %1428 = vmatpush1.bf16.msra.mxu0 %v1101
    %1429 = vmatprep.subr.bf16.mxu0 %v1106
    %1430 = vmatpush1.bf16.msra.mxu0 %v1105
    %1431 = vmatprep.subr.bf16.mxu0 %v1110
    %1432 = vmatpush1.bf16.msra.mxu0 %v1109
    %1433 = vmatprep.subr.bf16.mxu0 %v1114
    %1434 = vmatpush1.bf16.msra.mxu0 %v1113
    %1435 = vmatprep.subr.bf16.mxu0 %v1118
    %1436 = vmatpush1.bf16.msra.mxu0 %v1117
    %1437 = vmatprep.subr.bf16.mxu0 %v1122
    %1438 = vmatpush1.bf16.msra.mxu0 %v1121
    %1439 = vmatprep.subr.bf16.mxu0 %v1126
    %1440 = vmatpush1.bf16.msra.mxu0 %v1125
    %1441 = vmatprep.subr.bf16.mxu0 %v1130
    %1442 = vmatpush1.bf16.msra.mxu0 %v1129
    %1443 = vmatprep.subr.bf16.mxu0 %v1134
    %1444 = vmatpush1.bf16.msra.mxu0 %v1133
    %1445 = vmatprep.subr.bf16.mxu0 %v1138
    %1446 = vmatpush1.bf16.msra.mxu0 %v1137
    %1447 = vmatprep.subr.bf16.mxu0 %v1142
    %1448 = vmatpush1.bf16.msra.mxu0 %v1141
    %1449 = vmatprep.mubr.bf16.mxu0 %v543
    %1450 = vmatmul.mubr.bf16.gmra.mrb[0].mxu0 %v542
    %v1451 = vpop.f32.mrb[0].mxu0
    %v1452 = vadd.f32 %v686, %v1451
    %v1453 = vpop.f32.mrb[0].mxu0
    %v1454 = vadd.f32 %v690, %v1453
    %v1455 = vpop.f32.mrb[0].mxu0
    %v1456 = vpop.f32.mrb[0].mxu0
    %1457 = vdwg.mxu0
    %1458 = vmatprep.subr.bf16.mxu0 %v1146
    %1459 = vmatpush1.bf16.msra.mxu0 %v1145
    %1460 = vmatprep.subr.bf16.mxu0 %v1150
    %1461 = vmatpush1.bf16.msra.mxu0 %v1149
    %1462 = vmatprep.subr.bf16.mxu0 %v1154
    %1463 = vmatpush1.bf16.msra.mxu0 %v1153
    %1464 = vmatprep.subr.bf16.mxu0 %v1158
    %1465 = vmatpush1.bf16.msra.mxu0 %v1157
    %1466 = vmatprep.subr.bf16.mxu0 %v1162
    %1467 = vmatpush1.bf16.msra.mxu0 %v1161
    %1468 = vmatprep.subr.bf16.mxu0 %v1166
    %1469 = vmatpush1.bf16.msra.mxu0 %v1165
    %1470 = vmatprep.subr.bf16.mxu0 %v1170
    %1471 = vmatpush1.bf16.msra.mxu0 %v1169
    %1472 = vmatprep.subr.bf16.mxu0 %v1174
    %1473 = vmatpush1.bf16.msra.mxu0 %v1173
    %1474 = vmatprep.subr.bf16.mxu0 %v1178
    %1475 = vmatpush1.bf16.msra.mxu0 %v1177
    %1476 = vmatprep.subr.bf16.mxu0 %v1182
    %1477 = vmatpush1.bf16.msra.mxu0 %v1181
    %1478 = vmatprep.subr.bf16.mxu0 %v1186
    %1479 = vmatpush1.bf16.msra.mxu0 %v1185
    %1480 = vmatprep.subr.bf16.mxu0 %v1190
    %1481 = vmatpush1.bf16.msra.mxu0 %v1189
    %1482 = vmatprep.subr.bf16.mxu0 %v1194
    %1483 = vmatpush1.bf16.msra.mxu0 %v1193
    %1484 = vmatprep.subr.bf16.mxu0 %v1198
    %1485 = vmatpush1.bf16.msra.mxu0 %v1197
    %1486 = vmatprep.subr.bf16.mxu0 %v1202
    %1487 = vmatpush1.bf16.msra.mxu0 %v1201
    %1488 = vmatprep.subr.bf16.mxu0 %v1206
    %1489 = vmatpush1.bf16.msra.mxu0 %v1205
    %1490 = vmatprep.mubr.bf16.mxu0 %v545
    %1491 = vmatmul.mubr.bf16.gmra.mrb[0].mxu0 %v544
    %v1492 = vpop.f32.mrb[0].mxu0
    %v1493 = vadd.f32 %v1452, %v1492
    %v1494 = vpop.f32.mrb[0].mxu0
    %v1495 = vadd.f32 %v1454, %v1494
    %v1496 = vpop.f32.mrb[0].mxu0
    %v1497 = vpop.f32.mrb[0].mxu0
    %1498 = vdwg.mxu0
    %v1499 = vmax.f32 %v1411, 0.0
    %v1500 = vmax.f32 %v1413, 0.0
    %v1501 = vmax.f32 %v1493, 0.0
    %v1502 = vmax.f32 %v1495, 0.0
    %s1503 = scalar_lea.vmem [#allocation10], 17
    %v1504 = vld [vmem:[%s1503] ss:$4 sm:$0xf]
    %s1505 = scalar_lea.vmem [#allocation10], 18
    %v1506 = vld [vmem:[%s1505] ss:$4 sm:$0xf]
    %v1507 = vrot.slane %v1499, 4
    %v1508 = vadd.f32 %v1499, %v1507
    %v1509 = vrot.slane %v1508, 2
    %v1510 = vadd.f32 %v1508, %v1509
    %v1511 = vrot.slane %v1510, 1
    %v1512 = vadd.f32 %v1510, %v1511
    %v1513 = vrot.slane %v1500, 4
    %v1514 = vadd.f32 %v1500, %v1513
    %v1515 = vrot.slane %v1514, 2
    %v1516 = vadd.f32 %v1514, %v1515
    %v1517 = vrot.slane %v1516, 1
    %v1518 = vadd.f32 %v1516, %v1517
    %v1519 = vrot.slane %v1501, 4
    %v1520 = vadd.f32 %v1501, %v1519
    %v1521 = vrot.slane %v1520, 2
    %v1522 = vadd.f32 %v1520, %v1521
    %v1523 = vrot.slane %v1522, 1
    %v1524 = vadd.f32 %v1522, %v1523
    %v1525 = vrot.slane %v1502, 4
    %v1526 = vadd.f32 %v1502, %v1525
    %v1527 = vrot.slane %v1526, 2
    %v1528 = vadd.f32 %v1526, %v1527
    %v1529 = vrot.slane %v1528, 1
    %v1530 = vadd.f32 %v1528, %v1529
    %v1531 = vmul.f32 %v1512, %v437
    %v1532 = vmul.f32 %v1518, %v437
    %v1533 = vmul.f32 %v1524, %v437
    %v1534 = vmul.f32 %v1530, %v437
    %v1535 = vsub.f32 %v1499, %v1531
    %v1536 = vsub.f32 %v1500, %v1532
    %v1537 = vsub.f32 %v1501, %v1533
    %v1538 = vsub.f32 %v1502, %v1534
    %v1539 = vmul.f32 %v1535, %v1535
    %v1540 = vmul.f32 %v1536, %v1536
    %v1541 = vmul.f32 %v1537, %v1537
    %v1542 = vmul.f32 %v1538, %v1538
    %v1543 = vrot.slane %v1539, 4
    %v1544 = vadd.f32 %v1539, %v1543
    %v1545 = vrot.slane %v1544, 2
    %v1546 = vadd.f32 %v1544, %v1545
    %v1547 = vrot.slane %v1546, 1
    %v1548 = vadd.f32 %v1546, %v1547
    %v1549 = vrot.slane %v1540, 4
    %v1550 = vadd.f32 %v1540, %v1549
    %v1551 = vrot.slane %v1550, 2
    %v1552 = vadd.f32 %v1550, %v1551
    %v1553 = vrot.slane %v1552, 1
    %v1554 = vadd.f32 %v1552, %v1553
    %v1555 = vrot.slane %v1541, 4
    %v1556 = vadd.f32 %v1541, %v1555
    %v1557 = vrot.slane %v1556, 2
    %v1558 = vadd.f32 %v1556, %v1557
    %v1559 = vrot.slane %v1558, 1
    %v1560 = vadd.f32 %v1558, %v1559
    %v1561 = vrot.slane %v1542, 4
    %v1562 = vadd.f32 %v1542, %v1561
    %v1563 = vrot.slane %v1562, 2
    %v1564 = vadd.f32 %v1562, %v1563
    %v1565 = vrot.slane %v1564, 1
    %v1566 = vadd.f32 %v1564, %v1565
    %v1567 = vmul.f32 %v1548, %v437
    %v1568 = vmul.f32 %v1554, %v437
    %v1569 = vmul.f32 %v1560, %v437
    %v1570 = vmul.f32 %v1566, %v437
    %v1571 = vadd.f32 %v1567, 1e-05
    %v1572 = vadd.f32 %v1568, 1e-05
    %v1573 = vadd.f32 %v1569, 1e-05
    %v1574 = vadd.f32 %v1570, 1e-05
    %v1575 = vrsqrt.pop %v1571
    %v1576 = vrsqrt.pop %v1572
    %v1577 = vrsqrt.pop %v1573
    %v1578 = vrsqrt.pop %v1574
    %v1579 = vmul.f32 %v1535, %v1575
    %v1580 = vmul.f32 %v1536, %v1576
    %v1581 = vmul.f32 %v1537, %v1577
    %v1582 = vmul.f32 %v1538, %v1578
    %v1584 = vlaneseq
    %v1585 = vshrl.u32 %v1584, 7
    %v1586 = vsub.s32 0, %v1585
    %v1587 = vrot.slane %v1504, %v1586
    %v1588 = vlaneseq
    %v1589 = vshrl.u32 %v1588, 7
    %v1590 = vsub.s32 1, %v1589
    %v1591 = vrot.slane %v1504, %v1590
    %v1592 = vlaneseq
    %v1593 = vshrl.u32 %v1592, 7
    %v1594 = vsub.s32 2, %v1593
    %v1595 = vrot.slane %v1504, %v1594
    %v1596 = vlaneseq
    %v1597 = vshrl.u32 %v1596, 7
    %v1598 = vsub.s32 3, %v1597
    %v1599 = vrot.slane %v1504, %v1598
    %v1604 = vmul.f32 %v1579, %v1587
    %v1605 = vmul.f32 %v1580, %v1591
    %v1606 = vmul.f32 %v1581, %v1595
    %v1607 = vmul.f32 %v1582, %v1599
    %v1609 = vlaneseq
    %v1610 = vshrl.u32 %v1609, 7
    %v1611 = vsub.s32 0, %v1610
    %v1612 = vrot.slane %v1506, %v1611
    %v1613 = vlaneseq
    %v1614 = vshrl.u32 %v1613, 7
    %v1615 = vsub.s32 1, %v1614
    %v1616 = vrot.slane %v1506, %v1615
    %v1617 = vlaneseq
    %v1618 = vshrl.u32 %v1617, 7
    %v1619 = vsub.s32 2, %v1618
    %v1620 = vrot.slane %v1506, %v1619
    %v1621 = vlaneseq
    %v1622 = vshrl.u32 %v1621, 7
    %v1623 = vsub.s32 3, %v1622
    %v1624 = vrot.slane %v1506, %v1623
    %v1629 = vadd.f32 %v1604, %v1612
    %v1630 = vadd.f32 %v1605, %v1616
    %v1631 = vadd.f32 %v1606, %v1620
    %v1632 = vadd.f32 %v1607, %v1624
    %s1633 = scalar_lea.vmem [#allocation10], 32
    %v1634 = vld [vmem:[%s1633] ss:$4 sm:$0x3]
    %v1635 = vpack.c.bf16 %v1629, %v1629
    %v1636 = vpack.c.bf16 %v1630, %v1630
    %v1637 = vpack.c.bf16 %v1631, %v1631
    %v1638 = vpack.c.bf16 %v1632, %v1632
    %v1639 = vld [vmem:[#allocation6] sm:$0xff]
    %v1640 = vld [vmem:[#allocation6 + $0x8] sm:$0xff]
    %v1641 = vld [vmem:[#allocation6 + $0x10] sm:$0xff]
    %v1642 = vld [vmem:[#allocation6 + $0x18] sm:$0xff]
    %v1643 = vld [vmem:[#allocation6 + $0x20] sm:$0xff]
    %v1644 = vld [vmem:[#allocation6 + $0x28] sm:$0xff]
    %v1645 = vld [vmem:[#allocation6 + $0x30] sm:$0xff]
    %v1646 = vld [vmem:[#allocation6 + $0x38] sm:$0xff]
    %v1647 = vld [vmem:[#allocation6 + $0x40] sm:$0xff]
    %v1648 = vld [vmem:[#allocation6 + $0x48] sm:$0xff]
    %v1649 = vld [vmem:[#allocation6 + $0x50] sm:$0xff]
    %v1650 = vld [vmem:[#allocation6 + $0x58] sm:$0xff]
    %v1651 = vld [vmem:[#allocation6 + $0x60] sm:$0xff]
    %v1652 = vld [vmem:[#allocation6 + $0x68] sm:$0xff]
    %v1653 = vld [vmem:[#allocation6 + $0x70] sm:$0xff]
    %v1654 = vld [vmem:[#allocation6 + $0x78] sm:$0xff]
    %v1655 = vld [vmem:[#allocation6 + $0x80] sm:$0xff]
    %v1656 = vld [vmem:[#allocation6 + $0x88] sm:$0xff]
    %v1657 = vld [vmem:[#allocation6 + $0x90] sm:$0xff]
    %v1658 = vld [vmem:[#allocation6 + $0x98] sm:$0xff]
    %v1659 = vld [vmem:[#allocation6 + $0xa0] sm:$0xff]
    %v1660 = vld [vmem:[#allocation6 + $0xa8] sm:$0xff]
    %v1661 = vld [vmem:[#allocation6 + $0xb0] sm:$0xff]
    %v1662 = vld [vmem:[#allocation6 + $0xb8] sm:$0xff]
    %v1663 = vld [vmem:[#allocation6 + $0xc0] sm:$0xff]
    %v1664 = vld [vmem:[#allocation6 + $0xc8] sm:$0xff]
    %v1665 = vld [vmem:[#allocation6 + $0xd0] sm:$0xff]
    %v1666 = vld [vmem:[#allocation6 + $0xd8] sm:$0xff]
    %v1667 = vld [vmem:[#allocation6 + $0xe0] sm:$0xff]
    %v1668 = vld [vmem:[#allocation6 + $0xe8] sm:$0xff]
    %v1669 = vld [vmem:[#allocation6 + $0xf0] sm:$0xff]
    %v1670 = vld [vmem:[#allocation6 + $0xf8] sm:$0xff]
    %v1671 = vld [vmem:[#allocation6 + $0x100] sm:$0xff]
    %v1672 = vld [vmem:[#allocation6 + $0x108] sm:$0xff]
    %v1673 = vld [vmem:[#allocation6 + $0x110] sm:$0xff]
    %v1674 = vld [vmem:[#allocation6 + $0x118] sm:$0xff]
    %v1675 = vld [vmem:[#allocation6 + $0x120] sm:$0xff]
    %v1676 = vld [vmem:[#allocation6 + $0x128] sm:$0xff]
    %v1677 = vld [vmem:[#allocation6 + $0x130] sm:$0xff]
    %v1678 = vld [vmem:[#allocation6 + $0x138] sm:$0xff]
    %v1679 = vld [vmem:[#allocation6 + $0x140] sm:$0xff]
    %v1680 = vld [vmem:[#allocation6 + $0x148] sm:$0xff]
    %v1681 = vld [vmem:[#allocation6 + $0x150] sm:$0xff]
    %v1682 = vld [vmem:[#allocation6 + $0x158] sm:$0xff]
    %v1683 = vld [vmem:[#allocation6 + $0x160] sm:$0xff]
    %v1684 = vld [vmem:[#allocation6 + $0x168] sm:$0xff]
    %v1685 = vld [vmem:[#allocation6 + $0x170] sm:$0xff]
    %v1686 = vld [vmem:[#allocation6 + $0x178] sm:$0xff]
    %v1687 = vld [vmem:[#allocation6 + $0x180] sm:$0xff]
    %v1688 = vld [vmem:[#allocation6 + $0x188] sm:$0xff]
    %v1689 = vld [vmem:[#allocation6 + $0x190] sm:$0xff]
    %v1690 = vld [vmem:[#allocation6 + $0x198] sm:$0xff]
    %v1691 = vld [vmem:[#allocation6 + $0x1a0] sm:$0xff]
    %v1692 = vld [vmem:[#allocation6 + $0x1a8] sm:$0xff]
    %v1693 = vld [vmem:[#allocation6 + $0x1b0] sm:$0xff]
    %v1694 = vld [vmem:[#allocation6 + $0x1b8] sm:$0xff]
    %v1695 = vld [vmem:[#allocation6 + $0x1c0] sm:$0xff]
    %v1696 = vld [vmem:[#allocation6 + $0x1c8] sm:$0xff]
    %v1697 = vld [vmem:[#allocation6 + $0x1d0] sm:$0xff]
    %v1698 = vld [vmem:[#allocation6 + $0x1d8] sm:$0xff]
    %v1699 = vld [vmem:[#allocation6 + $0x1e0] sm:$0xff]
    %v1700 = vld [vmem:[#allocation6 + $0x1e8] sm:$0xff]
    %v1701 = vld [vmem:[#allocation6 + $0x1f0] sm:$0xff]
    %v1702 = vld [vmem:[#allocation6 + $0x1f8] sm:$0xff]
    %v1704 = vlaneseq
    %v1705 = vshrl.u32 %v1704, 7
    %v1706 = vsub.s32 0, %v1705
    %v1707 = vrot.slane %v1634, %v1706
    %v1708 = vlaneseq
    %v1709 = vshrl.u32 %v1708, 7
    %v1710 = vsub.s32 1, %v1709
    %v1711 = vrot.slane %v1634, %v1710
    %v1778 = vunpack.c.l.b16 %v1639
    %v1779 = vunpack.c.h.b16 %v1639
    %v1780 = vunpack.c.l.b16 %v1640
    %v1781 = vunpack.c.h.b16 %v1640
    %v1782 = vunpack.c.l.b16 %v1641
    %v1783 = vunpack.c.h.b16 %v1641
    %v1784 = vunpack.c.l.b16 %v1642
    %v1785 = vunpack.c.h.b16 %v1642
    %v1786 = vunpack.c.l.b16 %v1643
    %v1787 = vunpack.c.h.b16 %v1643
    %v1788 = vunpack.c.l.b16 %v1644
    %v1789 = vunpack.c.h.b16 %v1644
    %v1790 = vunpack.c.l.b16 %v1645
    %v1791 = vunpack.c.h.b16 %v1645
    %v1792 = vunpack.c.l.b16 %v1646
    %v1793 = vunpack.c.h.b16 %v1646
    %v1794 = vunpack.c.l.b16 %v1647
    %v1795 = vunpack.c.h.b16 %v1647
    %v1796 = vunpack.c.l.b16 %v1648
    %v1797 = vunpack.c.h.b16 %v1648
    %v1798 = vunpack.c.l.b16 %v1649
    %v1799 = vunpack.c.h.b16 %v1649
    %v1800 = vunpack.c.l.b16 %v1650
    %v1801 = vunpack.c.h.b16 %v1650
    %v1802 = vunpack.c.l.b16 %v1651
    %v1803 = vunpack.c.h.b16 %v1651
    %v1804 = vunpack.c.l.b16 %v1652
    %v1805 = vunpack.c.h.b16 %v1652
    %v1806 = vunpack.c.l.b16 %v1653
    %v1807 = vunpack.c.h.b16 %v1653
    %v1808 = vunpack.c.l.b16 %v1654
    %v1809 = vunpack.c.h.b16 %v1654
    %v1810 = vunpack.c.l.b16 %v1655
    %v1811 = vunpack.c.h.b16 %v1655
    %v1812 = vunpack.c.l.b16 %v1656
    %v1813 = vunpack.c.h.b16 %v1656
    %v1814 = vunpack.c.l.b16 %v1657
    %v1815 = vunpack.c.h.b16 %v1657
    %v1816 = vunpack.c.l.b16 %v1658
    %v1817 = vunpack.c.h.b16 %v1658
    %v1818 = vunpack.c.l.b16 %v1659
    %v1819 = vunpack.c.h.b16 %v1659
    %v1820 = vunpack.c.l.b16 %v1660
    %v1821 = vunpack.c.h.b16 %v1660
    %v1822 = vunpack.c.l.b16 %v1661
    %v1823 = vunpack.c.h.b16 %v1661
    %v1824 = vunpack.c.l.b16 %v1662
    %v1825 = vunpack.c.h.b16 %v1662
    %v1826 = vunpack.c.l.b16 %v1663
    %v1827 = vunpack.c.h.b16 %v1663
    %v1828 = vunpack.c.l.b16 %v1664
    %v1829 = vunpack.c.h.b16 %v1664
    %v1830 = vunpack.c.l.b16 %v1665
    %v1831 = vunpack.c.h.b16 %v1665
    %v1832 = vunpack.c.l.b16 %v1666
    %v1833 = vunpack.c.h.b16 %v1666
    %v1834 = vunpack.c.l.b16 %v1667
    %v1835 = vunpack.c.h.b16 %v1667
    %v1836 = vunpack.c.l.b16 %v1668
    %v1837 = vunpack.c.h.b16 %v1668
    %v1838 = vunpack.c.l.b16 %v1669
    %v1839 = vunpack.c.h.b16 %v1669
    %v1840 = vunpack.c.l.b16 %v1670
    %v1841 = vunpack.c.h.b16 %v1670
    %v1842 = vunpack.c.l.b16 %v1671
    %v1843 = vunpack.c.h.b16 %v1671
    %v1844 = vunpack.c.l.b16 %v1672
    %v1845 = vunpack.c.h.b16 %v1672
    %v1846 = vunpack.c.l.b16 %v1673
    %v1847 = vunpack.c.h.b16 %v1673
    %v1848 = vunpack.c.l.b16 %v1674
    %v1849 = vunpack.c.h.b16 %v1674
    %v1850 = vunpack.c.l.b16 %v1675
    %v1851 = vunpack.c.h.b16 %v1675
    %v1852 = vunpack.c.l.b16 %v1676
    %v1853 = vunpack.c.h.b16 %v1676
    %v1854 = vunpack.c.l.b16 %v1677
    %v1855 = vunpack.c.h.b16 %v1677
    %v1856 = vunpack.c.l.b16 %v1678
    %v1857 = vunpack.c.h.b16 %v1678
    %v1858 = vunpack.c.l.b16 %v1679
    %v1859 = vunpack.c.h.b16 %v1679
    %v1860 = vunpack.c.l.b16 %v1680
    %v1861 = vunpack.c.h.b16 %v1680
    %v1862 = vunpack.c.l.b16 %v1681
    %v1863 = vunpack.c.h.b16 %v1681
    %v1864 = vunpack.c.l.b16 %v1682
    %v1865 = vunpack.c.h.b16 %v1682
    %v1866 = vunpack.c.l.b16 %v1683
    %v1867 = vunpack.c.h.b16 %v1683
    %v1868 = vunpack.c.l.b16 %v1684
    %v1869 = vunpack.c.h.b16 %v1684
    %v1870 = vunpack.c.l.b16 %v1685
    %v1871 = vunpack.c.h.b16 %v1685
    %v1872 = vunpack.c.l.b16 %v1686
    %v1873 = vunpack.c.h.b16 %v1686
    %v1874 = vunpack.c.l.b16 %v1687
    %v1875 = vunpack.c.h.b16 %v1687
    %v1876 = vunpack.c.l.b16 %v1688
    %v1877 = vunpack.c.h.b16 %v1688
    %v1878 = vunpack.c.l.b16 %v1689
    %v1879 = vunpack.c.h.b16 %v1689
    %v1880 = vunpack.c.l.b16 %v1690
    %v1881 = vunpack.c.h.b16 %v1690
    %v1882 = vunpack.c.l.b16 %v1691
    %v1883 = vunpack.c.h.b16 %v1691
    %v1884 = vunpack.c.l.b16 %v1692
    %v1885 = vunpack.c.h.b16 %v1692
    %v1886 = vunpack.c.l.b16 %v1693
    %v1887 = vunpack.c.h.b16 %v1693
    %v1888 = vunpack.c.l.b16 %v1694
    %v1889 = vunpack.c.h.b16 %v1694
    %v1890 = vunpack.c.l.b16 %v1695
    %v1891 = vunpack.c.h.b16 %v1695
    %v1892 = vunpack.c.l.b16 %v1696
    %v1893 = vunpack.c.h.b16 %v1696
    %v1894 = vunpack.c.l.b16 %v1697
    %v1895 = vunpack.c.h.b16 %v1697
    %v1896 = vunpack.c.l.b16 %v1698
    %v1897 = vunpack.c.h.b16 %v1698
    %v1898 = vunpack.c.l.b16 %v1699
    %v1899 = vunpack.c.h.b16 %v1699
    %v1900 = vunpack.c.l.b16 %v1700
    %v1901 = vunpack.c.h.b16 %v1700
    %v1902 = vunpack.c.l.b16 %v1701
    %v1903 = vunpack.c.h.b16 %v1701
    %v1904 = vunpack.c.l.b16 %v1702
    %v1905 = vunpack.c.h.b16 %v1702
    %v1906 = vpack.c.b16 %v1780, %v1778
    %v1907 = vpack.c.b16 %v1781, %v1779
    %v1908 = vpack.c.b16 %v1784, %v1782
    %v1909 = vpack.c.b16 %v1785, %v1783
    %v1910 = vpack.c.b16 %v1788, %v1786
    %v1911 = vpack.c.b16 %v1789, %v1787
    %v1912 = vpack.c.b16 %v1792, %v1790
    %v1913 = vpack.c.b16 %v1793, %v1791
    %v1914 = vpack.c.b16 %v1796, %v1794
    %v1915 = vpack.c.b16 %v1797, %v1795
    %v1916 = vpack.c.b16 %v1800, %v1798
    %v1917 = vpack.c.b16 %v1801, %v1799
    %v1918 = vpack.c.b16 %v1804, %v1802
    %v1919 = vpack.c.b16 %v1805, %v1803
    %v1920 = vpack.c.b16 %v1808, %v1806
    %v1921 = vpack.c.b16 %v1809, %v1807
    %v1922 = vpack.c.b16 %v1812, %v1810
    %v1923 = vpack.c.b16 %v1813, %v1811
    %v1924 = vpack.c.b16 %v1816, %v1814
    %v1925 = vpack.c.b16 %v1817, %v1815
    %v1926 = vpack.c.b16 %v1820, %v1818
    %v1927 = vpack.c.b16 %v1821, %v1819
    %v1928 = vpack.c.b16 %v1824, %v1822
    %v1929 = vpack.c.b16 %v1825, %v1823
    %v1930 = vpack.c.b16 %v1828, %v1826
    %v1931 = vpack.c.b16 %v1829, %v1827
    %v1932 = vpack.c.b16 %v1832, %v1830
    %v1933 = vpack.c.b16 %v1833, %v1831
    %v1934 = vpack.c.b16 %v1836, %v1834
    %v1935 = vpack.c.b16 %v1837, %v1835
    %v1936 = vpack.c.b16 %v1840, %v1838
    %v1937 = vpack.c.b16 %v1841, %v1839
    %v1938 = vpack.c.b16 %v1844, %v1842
    %v1939 = vpack.c.b16 %v1845, %v1843
    %v1940 = vpack.c.b16 %v1848, %v1846
    %v1941 = vpack.c.b16 %v1849, %v1847
    %v1942 = vpack.c.b16 %v1852, %v1850
    %v1943 = vpack.c.b16 %v1853, %v1851
    %v1944 = vpack.c.b16 %v1856, %v1854
    %v1945 = vpack.c.b16 %v1857, %v1855
    %v1946 = vpack.c.b16 %v1860, %v1858
    %v1947 = vpack.c.b16 %v1861, %v1859
    %v1948 = vpack.c.b16 %v1864, %v1862
    %v1949 = vpack.c.b16 %v1865, %v1863
    %v1950 = vpack.c.b16 %v1868, %v1866
    %v1951 = vpack.c.b16 %v1869, %v1867
    %v1952 = vpack.c.b16 %v1872, %v1870
    %v1953 = vpack.c.b16 %v1873, %v1871
    %v1954 = vpack.c.b16 %v1876, %v1874
    %v1955 = vpack.c.b16 %v1877, %v1875
    %v1956 = vpack.c.b16 %v1880, %v1878
    %v1957 = vpack.c.b16 %v1881, %v1879
    %v1958 = vpack.c.b16 %v1884, %v1882
    %v1959 = vpack.c.b16 %v1885, %v1883
    %v1960 = vpack.c.b16 %v1888, %v1886
    %v1961 = vpack.c.b16 %v1889, %v1887
    %v1962 = vpack.c.b16 %v1892, %v1890
    %v1963 = vpack.c.b16 %v1893, %v1891
    %v1964 = vpack.c.b16 %v1896, %v1894
    %v1965 = vpack.c.b16 %v1897, %v1895
    %v1966 = vpack.c.b16 %v1900, %v1898
    %v1967 = vpack.c.b16 %v1901, %v1899
    %v1968 = vpack.c.b16 %v1904, %v1902
    %v1969 = vpack.c.b16 %v1905, %v1903
    %2034 = vmatprep.subr.bf16.mxu0 %v1907
    %2035 = vmatpush1.bf16.msra.mxu0 %v1906
    %2036 = vmatprep.subr.bf16.mxu0 %v1909
    %2037 = vmatpush1.bf16.msra.mxu0 %v1908
    %2038 = vmatprep.subr.bf16.mxu0 %v1911
    %2039 = vmatpush1.bf16.msra.mxu0 %v1910
    %2040 = vmatprep.subr.bf16.mxu0 %v1913
    %2041 = vmatpush1.bf16.msra.mxu0 %v1912
    %2042 = vmatprep.subr.bf16.mxu0 %v1915
    %2043 = vmatpush1.bf16.msra.mxu0 %v1914
    %2044 = vmatprep.subr.bf16.mxu0 %v1917
    %2045 = vmatpush1.bf16.msra.mxu0 %v1916
    %2046 = vmatprep.subr.bf16.mxu0 %v1919
    %2047 = vmatpush1.bf16.msra.mxu0 %v1918
    %2048 = vmatprep.subr.bf16.mxu0 %v1921
    %2049 = vmatpush1.bf16.msra.mxu0 %v1920
    %2050 = vmatprep.subr.bf16.mxu0 %v1923
    %2051 = vmatpush1.bf16.msra.mxu0 %v1922
    %2052 = vmatprep.subr.bf16.mxu0 %v1925
    %2053 = vmatpush1.bf16.msra.mxu0 %v1924
    %2054 = vmatprep.subr.bf16.mxu0 %v1927
    %2055 = vmatpush1.bf16.msra.mxu0 %v1926
    %2056 = vmatprep.subr.bf16.mxu0 %v1929
    %2057 = vmatpush1.bf16.msra.mxu0 %v1928
    %2058 = vmatprep.subr.bf16.mxu0 %v1931
    %2059 = vmatpush1.bf16.msra.mxu0 %v1930
    %2060 = vmatprep.subr.bf16.mxu0 %v1933
    %2061 = vmatpush1.bf16.msra.mxu0 %v1932
    %2062 = vmatprep.subr.bf16.mxu0 %v1935
    %2063 = vmatpush1.bf16.msra.mxu0 %v1934
    %2064 = vmatprep.subr.bf16.mxu0 %v1937
    %2065 = vmatpush1.bf16.msra.mxu0 %v1936
    %2066 = vmatprep.mubr.bf16.mxu0 %v1636
    %2067 = vmatmul.mubr.bf16.gmra.mrb[0].mxu0 %v1635
    %v2068 = vpop.f32.mrb[0].mxu0
    %v2069 = vadd.f32 %v1707, %v2068
    %v2070 = vpop.f32.mrb[0].mxu0
    %v2071 = vadd.f32 %v1711, %v2070
    %v2072 = vpop.f32.mrb[0].mxu0
    %v2073 = vpop.f32.mrb[0].mxu0
    %2074 = vdwg.mxu0
    %2075 = vmatprep.subr.bf16.mxu0 %v1939
    %2076 = vmatpush1.bf16.msra.mxu0 %v1938
    %2077 = vmatprep.subr.bf16.mxu0 %v1941
    %2078 = vmatpush1.bf16.msra.mxu0 %v1940
    %2079 = vmatprep.subr.bf16.mxu0 %v1943
    %2080 = vmatpush1.bf16.msra.mxu0 %v1942
    %2081 = vmatprep.subr.bf16.mxu0 %v1945
    %2082 = vmatpush1.bf16.msra.mxu0 %v1944
    %2083 = vmatprep.subr.bf16.mxu0 %v1947
    %2084 = vmatpush1.bf16.msra.mxu0 %v1946
    %2085 = vmatprep.subr.bf16.mxu0 %v1949
    %2086 = vmatpush1.bf16.msra.mxu0 %v1948
    %2087 = vmatprep.subr.bf16.mxu0 %v1951
    %2088 = vmatpush1.bf16.msra.mxu0 %v1950
    %2089 = vmatprep.subr.bf16.mxu0 %v1953
    %2090 = vmatpush1.bf16.msra.mxu0 %v1952
    %2091 = vmatprep.subr.bf16.mxu0 %v1955
    %2092 = vmatpush1.bf16.msra.mxu0 %v1954
    %2093 = vmatprep.subr.bf16.mxu0 %v1957
    %2094 = vmatpush1.bf16.msra.mxu0 %v1956
    %2095 = vmatprep.subr.bf16.mxu0 %v1959
    %2096 = vmatpush1.bf16.msra.mxu0 %v1958
    %2097 = vmatprep.subr.bf16.mxu0 %v1961
    %2098 = vmatpush1.bf16.msra.mxu0 %v1960
    %2099 = vmatprep.subr.bf16.mxu0 %v1963
    %2100 = vmatpush1.bf16.msra.mxu0 %v1962
    %2101 = vmatprep.subr.bf16.mxu0 %v1965
    %2102 = vmatpush1.bf16.msra.mxu0 %v1964
    %2103 = vmatprep.subr.bf16.mxu0 %v1967
    %2104 = vmatpush1.bf16.msra.mxu0 %v1966
    %2105 = vmatprep.subr.bf16.mxu0 %v1969
    %2106 = vmatpush1.bf16.msra.mxu0 %v1968
    %2107 = vmatprep.mubr.bf16.mxu0 %v1638
    %2108 = vmatmul.mubr.bf16.gmra.mrb[0].mxu0 %v1637
    %v2109 = vpop.f32.mrb[0].mxu0
    %v2110 = vadd.f32 %v2069, %v2109
    %v2111 = vpop.f32.mrb[0].mxu0
    %v2112 = vadd.f32 %v2071, %v2111
    %v2113 = vpop.f32.mrb[0].mxu0
    %v2114 = vpop.f32.mrb[0].mxu0
    %2115 = vdwg.mxu0
    %v2116 = vmax.f32 %v2110, 0.0
    %v2117 = vmax.f32 %v2112, 0.0
    %s2118 = scalar_lea.vmem [#allocation10], 33
    %v2119 = vld [vmem:[%s2118] ss:$4 sm:$0x3]
    %s2120 = scalar_lea.vmem [#allocation10], 34
    %v2121 = vld [vmem:[%s2120] ss:$4 sm:$0x3]
    %v2122 = vrot.slane %v2116, 4
    %v2123 = vadd.f32 %v2116, %v2122
    %v2124 = vrot.slane %v2123, 2
    %v2125 = vadd.f32 %v2123, %v2124
    %v2126 = vrot.slane %v2125, 1
    %v2127 = vadd.f32 %v2125, %v2126
    %v2128 = vrot.slane %v2117, 4
    %v2129 = vadd.f32 %v2117, %v2128
    %v2130 = vrot.slane %v2129, 2
    %v2131 = vadd.f32 %v2129, %v2130
    %v2132 = vrot.slane %v2131, 1
    %v2133 = vadd.f32 %v2131, %v2132
    %v2134 = vmul.f32 %v2127, %v437
    %v2135 = vmul.f32 %v2133, %v437
    %v2136 = vsub.f32 %v2116, %v2134
    %v2137 = vsub.f32 %v2117, %v2135
    %v2138 = vmul.f32 %v2136, %v2136
    %v2139 = vmul.f32 %v2137, %v2137
    %v2140 = vrot.slane %v2138, 4
    %v2141 = vadd.f32 %v2138, %v2140
    %v2142 = vrot.slane %v2141, 2
    %v2143 = vadd.f32 %v2141, %v2142
    %v2144 = vrot.slane %v2143, 1
    %v2145 = vadd.f32 %v2143, %v2144
    %v2146 = vrot.slane %v2139, 4
    %v2147 = vadd.f32 %v2139, %v2146
    %v2148 = vrot.slane %v2147, 2
    %v2149 = vadd.f32 %v2147, %v2148
    %v2150 = vrot.slane %v2149, 1
    %v2151 = vadd.f32 %v2149, %v2150
    %v2152 = vmul.f32 %v2145, %v437
    %v2153 = vmul.f32 %v2151, %v437
    %v2154 = vadd.f32 %v2152, 1e-05
    %v2155 = vadd.f32 %v2153, 1e-05
    %v2156 = vrsqrt.pop %v2154
    %v2157 = vrsqrt.pop %v2155
    %v2158 = vmul.f32 %v2136, %v2156
    %v2159 = vmul.f32 %v2137, %v2157
    %v2161 = vlaneseq
    %v2162 = vshrl.u32 %v2161, 7
    %v2163 = vsub.s32 0, %v2162
    %v2164 = vrot.slane %v2119, %v2163
    %v2165 = vlaneseq
    %v2166 = vshrl.u32 %v2165, 7
    %v2167 = vsub.s32 1, %v2166
    %v2168 = vrot.slane %v2119, %v2167
    %v2171 = vmul.f32 %v2158, %v2164
    %v2172 = vmul.f32 %v2159, %v2168
    %v2174 = vlaneseq
    %v2175 = vshrl.u32 %v2174, 7
    %v2176 = vsub.s32 0, %v2175
    %v2177 = vrot.slane %v2121, %v2176
    %v2178 = vlaneseq
    %v2179 = vshrl.u32 %v2178, 7
    %v2180 = vsub.s32 1, %v2179
    %v2181 = vrot.slane %v2121, %v2180
    %v2184 = vadd.f32 %v2171, %v2177
    %v2185 = vadd.f32 %v2172, %v2181
    %s2186 = scalar_lea.vmem [#allocation10], 40
    %v2187 = vld [vmem:[%s2186] ss:$4 sm:$0x3]
    %v2188 = vpack.c.bf16 %v2184, %v2184
    %v2189 = vpack.c.bf16 %v2185, %v2185
    %v2190 = vld [vmem:[#allocation7] sm:$0xff]
    %v2191 = vld [vmem:[#allocation7 + $0x8] sm:$0xff]
    %v2192 = vld [vmem:[#allocation7 + $0x10] sm:$0xff]
    %v2193 = vld [vmem:[#allocation7 + $0x18] sm:$0xff]
    %v2194 = vld [vmem:[#allocation7 + $0x20] sm:$0xff]
    %v2195 = vld [vmem:[#allocation7 + $0x28] sm:$0xff]
    %v2196 = vld [vmem:[#allocation7 + $0x30] sm:$0xff]
    %v2197 = vld [vmem:[#allocation7 + $0x38] sm:$0xff]
    %v2198 = vld [vmem:[#allocation7 + $0x40] sm:$0xff]
    %v2199 = vld [vmem:[#allocation7 + $0x48] sm:$0xff]
    %v2200 = vld [vmem:[#allocation7 + $0x50] sm:$0xff]
    %v2201 = vld [vmem:[#allocation7 + $0x58] sm:$0xff]
    %v2202 = vld [vmem:[#allocation7 + $0x60] sm:$0xff]
    %v2203 = vld [vmem:[#allocation7 + $0x68] sm:$0xff]
    %v2204 = vld [vmem:[#allocation7 + $0x70] sm:$0xff]
    %v2205 = vld [vmem:[#allocation7 + $0x78] sm:$0xff]
    %v2206 = vld [vmem:[#allocation7 + $0x80] sm:$0xff]
    %v2207 = vld [vmem:[#allocation7 + $0x88] sm:$0xff]
    %v2208 = vld [vmem:[#allocation7 + $0x90] sm:$0xff]
    %v2209 = vld [vmem:[#allocation7 + $0x98] sm:$0xff]
    %v2210 = vld [vmem:[#allocation7 + $0xa0] sm:$0xff]
    %v2211 = vld [vmem:[#allocation7 + $0xa8] sm:$0xff]
    %v2212 = vld [vmem:[#allocation7 + $0xb0] sm:$0xff]
    %v2213 = vld [vmem:[#allocation7 + $0xb8] sm:$0xff]
    %v2214 = vld [vmem:[#allocation7 + $0xc0] sm:$0xff]
    %v2215 = vld [vmem:[#allocation7 + $0xc8] sm:$0xff]
    %v2216 = vld [vmem:[#allocation7 + $0xd0] sm:$0xff]
    %v2217 = vld [vmem:[#allocation7 + $0xd8] sm:$0xff]
    %v2218 = vld [vmem:[#allocation7 + $0xe0] sm:$0xff]
    %v2219 = vld [vmem:[#allocation7 + $0xe8] sm:$0xff]
    %v2220 = vld [vmem:[#allocation7 + $0xf0] sm:$0xff]
    %v2221 = vld [vmem:[#allocation7 + $0xf8] sm:$0xff]
    %v2223 = vlaneseq
    %v2224 = vshrl.u32 %v2223, 7
    %v2225 = vsub.s32 0, %v2224
    %v2226 = vrot.slane %v2187, %v2225
    %v2227 = vlaneseq
    %v2228 = vshrl.u32 %v2227, 7
    %v2229 = vsub.s32 1, %v2228
    %v2230 = vrot.slane %v2187, %v2229
    %v2265 = vunpack.c.l.b16 %v2190
    %v2266 = vunpack.c.h.b16 %v2190
    %v2267 = vunpack.c.l.b16 %v2191
    %v2268 = vunpack.c.h.b16 %v2191
    %v2269 = vunpack.c.l.b16 %v2192
    %v2270 = vunpack.c.h.b16 %v2192
    %v2271 = vunpack.c.l.b16 %v2193
    %v2272 = vunpack.c.h.b16 %v2193
    %v2273 = vunpack.c.l.b16 %v2194
    %v2274 = vunpack.c.h.b16 %v2194
    %v2275 = vunpack.c.l.b16 %v2195
    %v2276 = vunpack.c.h.b16 %v2195
    %v2277 = vunpack.c.l.b16 %v2196
    %v2278 = vunpack.c.h.b16 %v2196
    %v2279 = vunpack.c.l.b16 %v2197
    %v2280 = vunpack.c.h.b16 %v2197
    %v2281 = vunpack.c.l.b16 %v2198
    %v2282 = vunpack.c.h.b16 %v2198
    %v2283 = vunpack.c.l.b16 %v2199
    %v2284 = vunpack.c.h.b16 %v2199
    %v2285 = vunpack.c.l.b16 %v2200
    %v2286 = vunpack.c.h.b16 %v2200
    %v2287 = vunpack.c.l.b16 %v2201
    %v2288 = vunpack.c.h.b16 %v2201
    %v2289 = vunpack.c.l.b16 %v2202
    %v2290 = vunpack.c.h.b16 %v2202
    %v2291 = vunpack.c.l.b16 %v2203
    %v2292 = vunpack.c.h.b16 %v2203
    %v2293 = vunpack.c.l.b16 %v2204
    %v2294 = vunpack.c.h.b16 %v2204
    %v2295 = vunpack.c.l.b16 %v2205
    %v2296 = vunpack.c.h.b16 %v2205
    %v2297 = vunpack.c.l.b16 %v2206
    %v2298 = vunpack.c.h.b16 %v2206
    %v2299 = vunpack.c.l.b16 %v2207
    %v2300 = vunpack.c.h.b16 %v2207
    %v2301 = vunpack.c.l.b16 %v2208
    %v2302 = vunpack.c.h.b16 %v2208
    %v2303 = vunpack.c.l.b16 %v2209
    %v2304 = vunpack.c.h.b16 %v2209
    %v2305 = vunpack.c.l.b16 %v2210
    %v2306 = vunpack.c.h.b16 %v2210
    %v2307 = vunpack.c.l.b16 %v2211
    %v2308 = vunpack.c.h.b16 %v2211
    %v2309 = vunpack.c.l.b16 %v2212
    %v2310 = vunpack.c.h.b16 %v2212
    %v2311 = vunpack.c.l.b16 %v2213
    %v2312 = vunpack.c.h.b16 %v2213
    %v2313 = vunpack.c.l.b16 %v2214
    %v2314 = vunpack.c.h.b16 %v2214
    %v2315 = vunpack.c.l.b16 %v2215
    %v2316 = vunpack.c.h.b16 %v2215
    %v2317 = vunpack.c.l.b16 %v2216
    %v2318 = vunpack.c.h.b16 %v2216
    %v2319 = vunpack.c.l.b16 %v2217
    %v2320 = vunpack.c.h.b16 %v2217
    %v2321 = vunpack.c.l.b16 %v2218
    %v2322 = vunpack.c.h.b16 %v2218
    %v2323 = vunpack.c.l.b16 %v2219
    %v2324 = vunpack.c.h.b16 %v2219
    %v2325 = vunpack.c.l.b16 %v2220
    %v2326 = vunpack.c.h.b16 %v2220
    %v2327 = vunpack.c.l.b16 %v2221
    %v2328 = vunpack.c.h.b16 %v2221
    %v2329 = vpack.c.b16 %v2267, %v2265
    %v2330 = vpack.c.b16 %v2268, %v2266
    %v2331 = vpack.c.b16 %v2271, %v2269
    %v2332 = vpack.c.b16 %v2272, %v2270
    %v2333 = vpack.c.b16 %v2275, %v2273
    %v2334 = vpack.c.b16 %v2276, %v2274
    %v2335 = vpack.c.b16 %v2279, %v2277
    %v2336 = vpack.c.b16 %v2280, %v2278
    %v2337 = vpack.c.b16 %v2283, %v2281
    %v2338 = vpack.c.b16 %v2284, %v2282
    %v2339 = vpack.c.b16 %v2287, %v2285
    %v2340 = vpack.c.b16 %v2288, %v2286
    %v2341 = vpack.c.b16 %v2291, %v2289
    %v2342 = vpack.c.b16 %v2292, %v2290
    %v2343 = vpack.c.b16 %v2295, %v2293
    %v2344 = vpack.c.b16 %v2296, %v2294
    %v2345 = vpack.c.b16 %v2299, %v2297
    %v2346 = vpack.c.b16 %v2300, %v2298
    %v2347 = vpack.c.b16 %v2303, %v2301
    %v2348 = vpack.c.b16 %v2304, %v2302
    %v2349 = vpack.c.b16 %v2307, %v2305
    %v2350 = vpack.c.b16 %v2308, %v2306
    %v2351 = vpack.c.b16 %v2311, %v2309
    %v2352 = vpack.c.b16 %v2312, %v2310
    %v2353 = vpack.c.b16 %v2315, %v2313
    %v2354 = vpack.c.b16 %v2316, %v2314
    %v2355 = vpack.c.b16 %v2319, %v2317
    %v2356 = vpack.c.b16 %v2320, %v2318
    %v2357 = vpack.c.b16 %v2323, %v2321
    %v2358 = vpack.c.b16 %v2324, %v2322
    %v2359 = vpack.c.b16 %v2327, %v2325
    %v2360 = vpack.c.b16 %v2328, %v2326
    %2393 = vmatprep.subr.bf16.mxu0 %v2330
    %2394 = vmatpush1.bf16.msra.mxu0 %v2329
    %2395 = vmatprep.subr.bf16.mxu0 %v2332
    %2396 = vmatpush1.bf16.msra.mxu0 %v2331
    %2397 = vmatprep.subr.bf16.mxu0 %v2334
    %2398 = vmatpush1.bf16.msra.mxu0 %v2333
    %2399 = vmatprep.subr.bf16.mxu0 %v2336
    %2400 = vmatpush1.bf16.msra.mxu0 %v2335
    %2401 = vmatprep.subr.bf16.mxu0 %v2338
    %2402 = vmatpush1.bf16.msra.mxu0 %v2337
    %2403 = vmatprep.subr.bf16.mxu0 %v2340
    %2404 = vmatpush1.bf16.msra.mxu0 %v2339
    %2405 = vmatprep.subr.bf16.mxu0 %v2342
    %2406 = vmatpush1.bf16.msra.mxu0 %v2341
    %2407 = vmatprep.subr.bf16.mxu0 %v2344
    %2408 = vmatpush1.bf16.msra.mxu0 %v2343
    %2409 = vmatprep.subr.bf16.mxu0 %v2346
    %2410 = vmatpush1.bf16.msra.mxu0 %v2345
    %2411 = vmatprep.subr.bf16.mxu0 %v2348
    %2412 = vmatpush1.bf16.msra.mxu0 %v2347
    %2413 = vmatprep.subr.bf16.mxu0 %v2350
    %2414 = vmatpush1.bf16.msra.mxu0 %v2349
    %2415 = vmatprep.subr.bf16.mxu0 %v2352
    %2416 = vmatpush1.bf16.msra.mxu0 %v2351
    %2417 = vmatprep.subr.bf16.mxu0 %v2354
    %2418 = vmatpush1.bf16.msra.mxu0 %v2353
    %2419 = vmatprep.subr.bf16.mxu0 %v2356
    %2420 = vmatpush1.bf16.msra.mxu0 %v2355
    %2421 = vmatprep.subr.bf16.mxu0 %v2358
    %2422 = vmatpush1.bf16.msra.mxu0 %v2357
    %2423 = vmatprep.subr.bf16.mxu0 %v2360
    %2424 = vmatpush1.bf16.msra.mxu0 %v2359
    %2425 = vmatprep.mubr.bf16.mxu0 %v2189
    %2426 = vmatmul.mubr.bf16.gmra.mrb[0].mxu0 %v2188
    %v2427 = vpop.f32.mrb[0].mxu0
    %v2428 = vadd.f32 %v2226, %v2427
    %v2429 = vpop.f32.mrb[0].mxu0
    %v2430 = vadd.f32 %v2230, %v2429
    %v2431 = vpop.f32.mrb[0].mxu0
    %v2432 = vpop.f32.mrb[0].mxu0
    %2433 = vdwg.mxu0
    %v2434 = vmax.f32 %v2428, 0.0
    %v2435 = vmax.f32 %v2430, 0.0
    %s2436 = scalar_lea.vmem [#allocation10], 41
    %v2437 = vld [vmem:[%s2436] ss:$4 sm:$0x3]
    %s2438 = scalar_lea.vmem [#allocation10], 42
    %v2439 = vld [vmem:[%s2438] ss:$4 sm:$0x3]
    %v2440 = vrot.slane %v2434, 4
    %v2441 = vadd.f32 %v2434, %v2440
    %v2442 = vrot.slane %v2441, 2
    %v2443 = vadd.f32 %v2441, %v2442
    %v2444 = vrot.slane %v2443, 1
    %v2445 = vadd.f32 %v2443, %v2444
    %v2446 = vrot.slane %v2435, 4
    %v2447 = vadd.f32 %v2435, %v2446
    %v2448 = vrot.slane %v2447, 2
    %v2449 = vadd.f32 %v2447, %v2448
    %v2450 = vrot.slane %v2449, 1
    %v2451 = vadd.f32 %v2449, %v2450
    %v2452 = vmul.f32 %v2445, %v437
    %v2453 = vmul.f32 %v2451, %v437
    %v2454 = vsub.f32 %v2434, %v2452
    %v2455 = vsub.f32 %v2435, %v2453
    %v2456 = vmul.f32 %v2454, %v2454
    %v2457 = vmul.f32 %v2455, %v2455
    %v2458 = vrot.slane %v2456, 4
    %v2459 = vadd.f32 %v2456, %v2458
    %v2460 = vrot.slane %v2459, 2
    %v2461 = vadd.f32 %v2459, %v2460
    %v2462 = vrot.slane %v2461, 1
    %v2463 = vadd.f32 %v2461, %v2462
    %v2464 = vrot.slane %v2457, 4
    %v2465 = vadd.f32 %v2457, %v2464
    %v2466 = vrot.slane %v2465, 2
    %v2467 = vadd.f32 %v2465, %v2466
    %v2468 = vrot.slane %v2467, 1
    %v2469 = vadd.f32 %v2467, %v2468
    %v2470 = vmul.f32 %v2463, %v437
    %v2471 = vmul.f32 %v2469, %v437
    %v2472 = vadd.f32 %v2470, 1e-05
    %v2473 = vadd.f32 %v2471, 1e-05
    %v2474 = vrsqrt.pop %v2472
    %v2475 = vrsqrt.pop %v2473
    %v2476 = vmul.f32 %v2454, %v2474
    %v2477 = vmul.f32 %v2455, %v2475
    %v2479 = vlaneseq
    %v2480 = vshrl.u32 %v2479, 7
    %v2481 = vsub.s32 0, %v2480
    %v2482 = vrot.slane %v2437, %v2481
    %v2483 = vlaneseq
    %v2484 = vshrl.u32 %v2483, 7
    %v2485 = vsub.s32 1, %v2484
    %v2486 = vrot.slane %v2437, %v2485
    %v2489 = vmul.f32 %v2476, %v2482
    %v2490 = vmul.f32 %v2477, %v2486
    %v2492 = vlaneseq
    %v2493 = vshrl.u32 %v2492, 7
    %v2494 = vsub.s32 0, %v2493
    %v2495 = vrot.slane %v2439, %v2494
    %v2496 = vlaneseq
    %v2497 = vshrl.u32 %v2496, 7
    %v2498 = vsub.s32 1, %v2497
    %v2499 = vrot.slane %v2439, %v2498
    %v2502 = vadd.f32 %v2489, %v2495
    %v2503 = vadd.f32 %v2490, %v2499
    %v2504 = vld [vmem:[#allocation10 + $0x30] sm:$0x1]
    %v2505 = vpack.c.bf16 %v2502, %v2502
    %v2506 = vpack.c.bf16 %v2503, %v2503
    %v2507 = vld [vmem:[#allocation9] sm:$0xf]
    %v2508 = vld [vmem:[#allocation9 + $0x4] sm:$0xf]
    %v2509 = vld [vmem:[#allocation9 + $0x8] sm:$0xf]
    %v2510 = vld [vmem:[#allocation9 + $0xc] sm:$0xf]
    %v2511 = vld [vmem:[#allocation9 + $0x10] sm:$0xf]
    %v2512 = vld [vmem:[#allocation9 + $0x14] sm:$0xf]
    %v2513 = vld [vmem:[#allocation9 + $0x18] sm:$0xf]
    %v2514 = vld [vmem:[#allocation9 + $0x1c] sm:$0xf]
    %v2515 = vld [vmem:[#allocation9 + $0x20] sm:$0xf]
    %v2516 = vld [vmem:[#allocation9 + $0x24] sm:$0xf]
    %v2517 = vld [vmem:[#allocation9 + $0x28] sm:$0xf]
    %v2518 = vld [vmem:[#allocation9 + $0x2c] sm:$0xf]
    %v2519 = vld [vmem:[#allocation9 + $0x30] sm:$0xf]
    %v2520 = vld [vmem:[#allocation9 + $0x34] sm:$0xf]
    %v2521 = vld [vmem:[#allocation9 + $0x38] sm:$0xf]
    %v2522 = vld [vmem:[#allocation9 + $0x3c] sm:$0xf]
    %v2523 = vld [vmem:[#allocation9 + $0x40] sm:$0xf]
    %v2524 = vld [vmem:[#allocation9 + $0x44] sm:$0xf]
    %v2525 = vld [vmem:[#allocation9 + $0x48] sm:$0xf]
    %v2526 = vld [vmem:[#allocation9 + $0x4c] sm:$0xf]
    %v2527 = vld [vmem:[#allocation9 + $0x50] sm:$0xf]
    %v2528 = vld [vmem:[#allocation9 + $0x54] sm:$0xf]
    %v2529 = vld [vmem:[#allocation9 + $0x58] sm:$0xf]
    %v2530 = vld [vmem:[#allocation9 + $0x5c] sm:$0xf]
    %v2531 = vld [vmem:[#allocation9 + $0x60] sm:$0xf]
    %v2532 = vld [vmem:[#allocation9 + $0x64] sm:$0xf]
    %v2533 = vld [vmem:[#allocation9 + $0x68] sm:$0xf]
    %v2534 = vld [vmem:[#allocation9 + $0x6c] sm:$0xf]
    %v2535 = vld [vmem:[#allocation9 + $0x70] sm:$0xf]
    %v2536 = vld [vmem:[#allocation9 + $0x74] sm:$0xf]
    %v2537 = vld [vmem:[#allocation9 + $0x78] sm:$0xf]
    %v2538 = vld [vmem:[#allocation9 + $0x7c] sm:$0xf]
    %v2539 = vlaneseq
    %v2540 = vshrl.u32 %v2539, 7
    %v2541 = vsub.s32 0, %v2540
    %v2542 = vrot.slane %v2504, %v2541
    %v2575 = vunpack.c.l.b16 %v2507
    %v2576 = vunpack.c.l.b16 %v2508
    %v2577 = vunpack.c.l.b16 %v2509
    %v2578 = vunpack.c.l.b16 %v2510
    %v2579 = vunpack.c.l.b16 %v2511
    %v2580 = vunpack.c.l.b16 %v2512
    %v2581 = vunpack.c.l.b16 %v2513
    %v2582 = vunpack.c.l.b16 %v2514
    %v2583 = vunpack.c.l.b16 %v2515
    %v2584 = vunpack.c.l.b16 %v2516
    %v2585 = vunpack.c.l.b16 %v2517
    %v2586 = vunpack.c.l.b16 %v2518
    %v2587 = vunpack.c.l.b16 %v2519
    %v2588 = vunpack.c.l.b16 %v2520
    %v2589 = vunpack.c.l.b16 %v2521
    %v2590 = vunpack.c.l.b16 %v2522
    %v2591 = vunpack.c.l.b16 %v2523
    %v2592 = vunpack.c.l.b16 %v2524
    %v2593 = vunpack.c.l.b16 %v2525
    %v2594 = vunpack.c.l.b16 %v2526
    %v2595 = vunpack.c.l.b16 %v2527
    %v2596 = vunpack.c.l.b16 %v2528
    %v2597 = vunpack.c.l.b16 %v2529
    %v2598 = vunpack.c.l.b16 %v2530
    %v2599 = vunpack.c.l.b16 %v2531
    %v2600 = vunpack.c.l.b16 %v2532
    %v2601 = vunpack.c.l.b16 %v2533
    %v2602 = vunpack.c.l.b16 %v2534
    %v2603 = vunpack.c.l.b16 %v2535
    %v2604 = vunpack.c.l.b16 %v2536
    %v2605 = vunpack.c.l.b16 %v2537
    %v2606 = vunpack.c.l.b16 %v2538
    %v2607 = vpack.c.b16 %v2576, %v2575
    %v2608 = vpack.c.b16 %v2578, %v2577
    %v2609 = vpack.c.b16 %v2580, %v2579
    %v2610 = vpack.c.b16 %v2582, %v2581
    %v2611 = vpack.c.b16 %v2584, %v2583
    %v2612 = vpack.c.b16 %v2586, %v2585
    %v2613 = vpack.c.b16 %v2588, %v2587
    %v2614 = vpack.c.b16 %v2590, %v2589
    %v2615 = vpack.c.b16 %v2592, %v2591
    %v2616 = vpack.c.b16 %v2594, %v2593
    %v2617 = vpack.c.b16 %v2596, %v2595
    %v2618 = vpack.c.b16 %v2598, %v2597
    %v2619 = vpack.c.b16 %v2600, %v2599
    %v2620 = vpack.c.b16 %v2602, %v2601
    %v2621 = vpack.c.b16 %v2604, %v2603
    %v2622 = vpack.c.b16 %v2606, %v2605
    %2639 = vmatprep.subr.bf16.mxu0 0
    %2640 = vmatpush1.bf16.msra.mxu0 %v2607
    %2641 = vmatprep.subr.bf16.mxu0 0
    %2642 = vmatpush1.bf16.msra.mxu0 %v2608
    %2643 = vmatprep.subr.bf16.mxu0 0
    %2644 = vmatpush1.bf16.msra.mxu0 %v2609
    %2645 = vmatprep.subr.bf16.mxu0 0
    %2646 = vmatpush1.bf16.msra.mxu0 %v2610
    %2647 = vmatprep.subr.bf16.mxu0 0
    %2648 = vmatpush1.bf16.msra.mxu0 %v2611
    %2649 = vmatprep.subr.bf16.mxu0 0
    %2650 = vmatpush1.bf16.msra.mxu0 %v2612
    %2651 = vmatprep.subr.bf16.mxu0 0
    %2652 = vmatpush1.bf16.msra.mxu0 %v2613
    %2653 = vmatprep.subr.bf16.mxu0 0
    %2654 = vmatpush1.bf16.msra.mxu0 %v2614
    %2655 = vmatprep.subr.bf16.mxu0 0
    %2656 = vmatpush1.bf16.msra.mxu0 %v2615
    %2657 = vmatprep.subr.bf16.mxu0 0
    %2658 = vmatpush1.bf16.msra.mxu0 %v2616
    %2659 = vmatprep.subr.bf16.mxu0 0
    %2660 = vmatpush1.bf16.msra.mxu0 %v2617
    %2661 = vmatprep.subr.bf16.mxu0 0
    %2662 = vmatpush1.bf16.msra.mxu0 %v2618
    %2663 = vmatprep.subr.bf16.mxu0 0
    %2664 = vmatpush1.bf16.msra.mxu0 %v2619
    %2665 = vmatprep.subr.bf16.mxu0 0
    %2666 = vmatpush1.bf16.msra.mxu0 %v2620
    %2667 = vmatprep.subr.bf16.mxu0 0
    %2668 = vmatpush1.bf16.msra.mxu0 %v2621
    %2669 = vmatprep.subr.bf16.mxu0 0
    %2670 = vmatpush1.bf16.msra.mxu0 %v2622
    %2671 = vmatprep.mubr.bf16.mxu0 %v2506
    %2672 = vmatmul.mubr.bf16.gmra.mrb[0].mxu0 %v2505
    %v2673 = vpop.f32.mrb[0].mxu0
    %v2674 = vadd.f32 %v2542, %v2673
    %v2675 = vpop.f32.mrb[0].mxu0
    %v2676 = vpop.f32.mrb[0].mxu0
    %v2677 = vpop.f32.mrb[0].mxu0
    %2678 = vdwg.mxu0
    %2679 = vst [vmem:[%s7] sm:$0xff] %v2674
    // Predicated region
    $region54: #{arm_network_forward.1} parent=1 // pred_check
      _
    $region55: #{arm_network_forward.1} parent=1 // pred_check_branch
      %2681 = sbr.rel (0) target = $region57
    $region56: #{arm_network_forward.1} parent=1 // pred_region
      _
    $region57: #{arm_network_forward.1} parent=1 // pred_fallthru
      _
    // Predicated region
    $region58: #{arm_network_forward.1} parent=1 // pred_check
      _
    $region59: #{arm_network_forward.1} parent=1 // pred_check_branch
      %2683 = sbr.rel (0) target = $region61
    $region60: #{arm_network_forward.1} parent=1 // pred_region
      _
    $region61: #{arm_network_forward.1} parent=1 // pred_fallthru
      _
    %2684 = vsyncpa [#allocation3], 1
    %2685 = vsyncpa [#allocation5], 1
    %2686 = vsyncpa [#allocation8], 1
    %2687 = vsyncpa [#allocation11], 1

</llo_original>
